<compile_context>
chip_gen: v7x
topology: tpu7x:2x2x1
jax: 0.10.0
libtpu: 0.0.40
codegen_flags: <defaults>
</compile_context>

<pallas_src>
import numpy as np
import jax
import jax.numpy as jnp
from jax import lax
from jax.experimental import pallas as pl
from jax.experimental.pallas import tpu as pltpu

EPS = 1e-5
GAUSS_KS = 9
GAUSS_SIGMA = 1.0


# ----------------------------------------------------------------------------
# host-side helpers: linear operators (Gaussian blur, bilinear up, pad, masks)
# ----------------------------------------------------------------------------
def _gauss1d(ks, sigma):
    x = np.arange(ks, dtype=np.float64) - (ks - 1) / 2.0
    g = np.exp(-(x ** 2) / (2.0 * sigma ** 2))
    return g / g.sum()                                   # float64


def _blur_matrix(n, ks, sigma):
    """1D Gaussian cross-correlation (zero padding, stride 1) as an (n, n) matrix."""
    g = _gauss1d(ks, sigma)
    pad = (ks - 1) // 2
    M = np.zeros((n, n), dtype=np.float64)
    for r in range(n):
        for k in range(ks):
            c = r + k - pad
            if 0 <= c < n:
                M[r, c] += g[k]
    return M


def _upsample_matrix(n_in, n_out):
    """Bilinear (align_corners=True) interpolation matrix of shape (n_out, n_in)."""
    M = np.zeros((n_out, n_in), dtype=np.float64)
    if n_in == 1 or n_out == 1:
        M[:, 0] = 1.0
        return M
    src = np.arange(n_out, dtype=np.float64) * (n_in - 1) / (n_out - 1)
    i0 = np.clip(np.floor(src).astype(np.int64), 0, n_in - 1)
    i1 = np.minimum(i0 + 1, n_in - 1)
    f = src - i0
    for r in range(n_out):
        M[r, i0[r]] += 1.0 - f[r]
        M[r, i1[r]] += f[r]
    return M


def _padded_upsample_matrix(n_in, n_target):
    """x2 bilinear upsample followed by F.pad-to-n_target, as one (n_target, n_in) matrix."""
    n_up = 2 * n_in
    assert n_target >= n_up, "negative F.pad (cropping) is not supported"
    M = _upsample_matrix(n_in, n_up)
    pad_lo = (n_target - n_up) // 2
    out = np.zeros((n_target, n_in), dtype=np.float64)
    for h in range(n_target):
        j = h - pad_lo
        if 0 <= j < n_up:
            out[h] = M[j]
    return out


def _tap_masks(H, W):
    """(8, H*W) border-validity masks for the non-center 3x3 taps (center needs none)."""
    P = H * W
    h = np.arange(P) // W
    w = np.arange(P) % W
    rows = []
    for ky in range(3):
        for kx in range(3):
            if ky == 1 and kx == 1:
                continue
            dy, dx = ky - 1, kx - 1
            ok = (h + dy >= 0) & (h + dy < H) & (w + dx >= 0) & (w + dx < W)
            rows.append(ok.astype(np.float32))
    return np.stack(rows, axis=0)


# ----------------------------------------------------------------------------
# parameters
# ----------------------------------------------------------------------------
def init_raw_params(key, in_channels, out_channels):
    """Deterministic synthetic parameters for DoubleConv(in_channels, out_channels)."""
    ks = jax.random.split(key, 12)
    cmid = out_channels

    def conv_bn(k0, k1, k2, k3, k4, k5, cin, cout):
        w = 0.2 * jax.random.normal(k0, (cout, cin, 3, 3), jnp.float32)
        b = 0.1 * jax.random.normal(k1, (cout,), jnp.float32)
        gamma = 1.0 + 0.1 * jax.random.normal(k2, (cout,), jnp.float32)
        beta = 0.1 * jax.random.normal(k3, (cout,), jnp.float32)
        mean = 0.1 * jax.random.normal(k4, (cout,), jnp.float32)
        var = 1.0 + 0.1 * jnp.abs(jax.random.normal(k5, (cout,), jnp.float32))
        return (w, b, gamma, beta, mean, var)

    p1 = conv_bn(*ks[0:6], in_channels, cmid)
    p2 = conv_bn(*ks[6:12], cmid, out_channels)
    return p1 + p2


def prepare_params(raw, c_skip):
    """Fold conv bias + BatchNorm (eval) into weights / per-channel shifts, fold the
    C1 replicated upsampled-x1 input channels of conv1 into a single column, and
    lay the weights out per 3x3 tap as (9, Cout, Cin)."""
    (w1, b1, ga1, be1, mu1, va1, w2, b2, ga2, be2, mu2, va2) = raw

    def fold(w, b, ga, be, mu, va):
        s = ga / jnp.sqrt(va + EPS)                      # BN scale
        t = (b - mu) * s + be                            # folded shift
        wf = w * s[:, None, None, None]                  # scale folded into weights
        return wf, t.reshape(-1, 1).astype(jnp.float32)

    w1f, t1 = fold(w1, b1, ga1, be1, mu1, va1)
    w2f, t2 = fold(w2, b2, ga2, be2, mu2, va2)

    # All upsampled-x1 channels are identical -> sum their conv1 input columns.
    w1_eff = jnp.concatenate(
        [w1f[:, :c_skip], jnp.sum(w1f[:, c_skip:], axis=1, keepdims=True)], axis=1)

    def to_taps(w):  # (Cout, Cin, 3, 3) -> (9, Cout, Cin), tap index = ky*3+kx
        cout, cin = w.shape[0], w.shape[1]
        return jnp.transpose(w, (2, 3, 0, 1)).reshape(9, cout, cin).astype(jnp.float32)

    return to_taps(w1_eff), t1, to_taps(w2f), t2


# ----------------------------------------------------------------------------
# Pallas kernel
# ----------------------------------------------------------------------------
def gaussian_up_forward_pallas(x1, x2, params):
    N, C1, H1, W1 = x1.shape
    N2, C2, H2, W2 = x2.shape
    assert N == N2
    w1t, t1, w2t, t2 = params
    Cin1, Cmid, Cout = w1t.shape[2], w1t.shape[1], w2t.shape[1]
    assert Cin1 == C2 + 1 and w1t.shape == (9, Cmid, Cin1) and w2t.shape == (9, Cout, Cmid)
    P = H2 * W2
    HW1 = H1 * W1

    # Fold 9x9 Gaussian blur -> x2 bilinear upsample -> F.pad into one operator
    # on the flattened (H1*W1) pixel axis (composed in float64, cast once).
    MH = _padded_upsample_matrix(H1, H2) @ _blur_matrix(H1, GAUSS_KS, GAUSS_SIGMA)
    MW = _padded_upsample_matrix(W1, W2) @ _blur_matrix(W1, GAUSS_KS, GAUSS_SIGMA)
    up_op = jnp.asarray(np.kron(MH, MW).T.astype(np.float32))   # (HW1, P)
    masks = jnp.asarray(_tap_masks(H2, W2))                     # (8, P)

    # lane-dense pixel layouts
    x1f = x1.reshape(N, C1, HW1)
    x2f = x2.reshape(N, C2, P)

    def kernel(x1_ref, x2_ref, up_ref, mk_ref, w1_ref, t1_ref, w2_ref, t2_ref, o_ref):
        mk = mk_ref[...]                                         # (8, P): one sublane tile

        # --- x1 path: every GaussianConv2d output channel equals the blur of
        # the channel-sum, so sum first, then one MXU matmul applies the fused
        # blur + bilinear upsample + F.pad operator. ---
        x1_sum = jnp.sum(x1_ref[0], axis=0, keepdims=True)       # (1, HW1)
        up_row = jnp.dot(x1_sum, up_ref[...],
                         preferred_element_type=jnp.float32)     # (1, P)

        # torch.cat([x2, x1_up], dim=1): the C1 identical x1 channels are
        # folded into the conv1 weights, so only one extra row is appended.
        x_cat = jnp.concatenate([x2_ref[0], up_row], axis=0)     # (C2+1, P)

        def conv_bn_relu(x, w_ref, t_ref):
            # 3x3 conv as 9 per-tap MXU dots accumulated in f32 (no im2col
            # materialization).  Taps = lane rolls + border masks (XLU work).
            acc = None
            for ky in range(3):
                for kx in range(3):
                    ti = ky * 3 + kx
                    d = (ky - 1) * W2 + (kx - 1)
                    if d == 0:
                        tap = x                                  # center tap: no mask
                    else:
                        mi = ti if ti < 4 else ti - 1
                        tap = pltpu.roll(x, shift=(-d) % P, axis=1) * mk[mi:mi + 1, :]
                    y = jnp.dot(w_ref[ti], tap,
                                preferred_element_type=jnp.float32)
                    acc = y if acc is None else acc + y
            return jnp.maximum(acc + t_ref[...], 0.0)            # BN shift + ReLU

        y1 = conv_bn_relu(x_cat, w1_ref, t1_ref)                 # (Cmid, P)
        y2 = conv_bn_relu(y1, w2_ref, t2_ref)                    # (Cout, P)
        o_ref[0] = y2.astype(o_ref.dtype)

    out = pl.pallas_call(
        kernel,
        out_shape=jax.ShapeDtypeStruct((N, Cout, P), jnp.float32),
        grid=(N,),
        in_specs=[
            pl.BlockSpec((1, C1, HW1), lambda n: (n, 0, 0)),     # x1 (flattened)
            pl.BlockSpec((1, C2, P), lambda n: (n, 0, 0)),       # x2 (flattened)
            pl.BlockSpec((HW1, P), lambda n: (0, 0)),            # blur+up+pad op
            pl.BlockSpec((8, P), lambda n: (0, 0)),              # tap masks (no center)
            pl.BlockSpec((9, Cmid, Cin1), lambda n: (0, 0, 0)),  # conv1 weights per tap
            pl.BlockSpec((Cmid, 1), lambda n: (0, 0)),           # conv1 shift
            pl.BlockSpec((9, Cout, Cmid), lambda n: (0, 0, 0)),  # conv2 weights per tap
            pl.BlockSpec((Cout, 1), lambda n: (0, 0)),           # conv2 shift
        ],
        out_specs=pl.BlockSpec((1, Cout, P), lambda n: (n, 0, 0)),
        compiler_params=pltpu.CompilerParams(dimension_semantics=("parallel",)),
    )(x1f, x2f, up_op, masks, w1t, t1, w2t, t2)
    return out.reshape(N, Cout, H2, W2)


# ----------------------------------------------------------------------------
# Pure-JAX reference (independent path: XLA convs + gather-based upsample)
# ----------------------------------------------------------------------------
def _bilinear_up2_ref(x):
    def interp(x, axis):
        n_in = x.shape[axis]
        n_out = 2 * n_in
        if n_in == 1:
            return jnp.repeat(x, 2, axis=axis)
        src = jnp.arange(n_out, dtype=jnp.float32) * (n_in - 1) / (n_out - 1)
        i0 = jnp.floor(src).astype(jnp.int32)
        i1 = jnp.minimum(i0 + 1, n_in - 1)
        f = src - i0.astype(jnp.float32)
        a = jnp.take(x, i0, axis=axis)
        b = jnp.take(x, i1, axis=axis)
        shp = [1] * x.ndim
        shp[axis] = n_out
        f = f.reshape(shp)
        return a * (1.0 - f) + b * f
    return interp(interp(x, 2), 3)


def gaussian_up_forward_ref(x1, x2, raw):
    (w1, b1, ga1, be1, mu1, va1, w2, b2, ga2, be2, mu2, va2) = raw
    C1 = x1.shape[1]

    # GaussianConv2d: fixed normalized 9x9 Gaussian, replicated over (out, in).
    gvec = _gauss1d(GAUSS_KS, GAUSS_SIGMA)
    g2d = np.outer(gvec, gvec).astype(np.float32)
    gk = jnp.asarray(np.tile(g2d[None, None], (C1, C1, 1, 1)))
    pad = (GAUSS_KS - 1) // 2
    x1b = lax.conv_general_dilated(x1, gk, (1, 1), ((pad, pad), (pad, pad)),
                                   dimension_numbers=("NCHW", "OIHW", "NCHW"))

    x1u = _bilinear_up2_ref(x1b)
    diffY = x2.shape[2] - x1u.shape[2]
    diffX = x2.shape[3] - x1u.shape[3]
    x1u = jnp.pad(x1u, ((0, 0), (0, 0),
                        (diffY // 2, diffY - diffY // 2),
                        (diffX // 2, diffX - diffX // 2)))
    x = jnp.concatenate([x2, x1u], axis=1)

    def cbr(x, w, b, ga, be, mu, va):
        y = lax.conv_general_dilated(x, w, (1, 1), ((1, 1), (1, 1)),
                                     dimension_numbers=("NCHW", "OIHW", "NCHW"))
        y = y + b[None, :, None, None]
        y = (y - mu[None, :, None, None]) / jnp.sqrt(va[None, :, None, None] + EPS)
        y = y * ga[None, :, None, None] + be[None, :, None, None]
        return jnp.maximum(y, 0.0)

    return cbr(cbr(x, w1, b1, ga1, be1, mu1, va1), w2, b2, ga2, be2, mu2, va2)


# ----------------------------------------------------------------------------
if __name__ == "__main__":
    key = jax.random.PRNGKey(0)
    kx1, kx2, kp = jax.random.split(key, 3)

    N = 2
    C1, H1, W1 = 4, 8, 8        # x1: in_channels//2 low-res features
    C2, H2, W2 = 4, 16, 16      # x2: skip connection
    in_channels, out_channels = C1 + C2, 8

    x1 = jax.random.normal(kx1, (N, C1, H1, W1), jnp.float32)
    x2 = jax.random.normal(kx2, (N, C2, H2, W2), jnp.float32)

    raw = init_raw_params(kp, in_channels, out_channels)
    params = prepare_params(raw, C2)

    out = gaussian_up_forward_pallas(x1, x2, params)
    out = jax.block_until_ready(out)

    ref = gaussian_up_forward_ref(x1, x2, raw)
    err = float(jnp.max(jnp.abs(out - ref)))
    assert out.shape == (N, out_channels, H2, W2)
    if err < 1e-3:
        print("KERNEL_OK")
    else:
        print(f"MISMATCH max_abs_err={err}")
</pallas_src>

<mosaic_0001>
module attributes {stable_mosaic.version = 11 : i64} {
  func.func @kernel(%arg0: i32, %arg1: memref<1x4x64xf32, #tpu.memory_space<vmem>>, %arg2: memref<1x4x256xf32, #tpu.memory_space<vmem>>, %arg3: memref<64x256xf32, #tpu.memory_space<vmem>>, %arg4: memref<8x256xf32, #tpu.memory_space<vmem>>, %arg5: memref<9x8x5xf32, #tpu.memory_space<vmem>>, %arg6: memref<8x1xf32, #tpu.memory_space<vmem>>, %arg7: memref<9x8x8xf32, #tpu.memory_space<vmem>>, %arg8: memref<8x1xf32, #tpu.memory_space<vmem>>, %arg9: memref<1x8x256xf32, #tpu.memory_space<vmem>>) attributes {dimension_semantics = [#tpu.dimension_semantics<parallel>], iteration_bounds = array<i64: 2>, scalar_prefetch = 0 : i64, scratch_operands = 0 : i64, tpu.core_type = #tpu.core_type<tc>, window_params = [{transform_indices = @transform_0, window_bounds = array<i64: 1, 4, 64>}, {transform_indices = @transform_1, window_bounds = array<i64: 1, 4, 256>}, {pipeline_mode = #tpu.pipeline_mode<synchronous>, transform_indices = @transform_2, window_bounds = array<i64: 64, 256>}, {pipeline_mode = #tpu.pipeline_mode<synchronous>, transform_indices = @transform_3, window_bounds = array<i64: 8, 256>}, {pipeline_mode = #tpu.pipeline_mode<synchronous>, transform_indices = @transform_4, window_bounds = array<i64: 9, 8, 5>}, {pipeline_mode = #tpu.pipeline_mode<synchronous>, transform_indices = @transform_5, window_bounds = array<i64: 8, 1>}, {pipeline_mode = #tpu.pipeline_mode<synchronous>, transform_indices = @transform_6, window_bounds = array<i64: 9, 8, 8>}, {pipeline_mode = #tpu.pipeline_mode<synchronous>, transform_indices = @transform_7, window_bounds = array<i64: 8, 1>}, {transform_indices = @transform_8, window_bounds = array<i64: 1, 8, 256>}]} {
    %c0 = arith.constant 0 : index
    %c0_0 = arith.constant 0 : index
    %0 = vector.load %arg4[%c0, %c0_0] : memref<8x256xf32, #tpu.memory_space<vmem>>, vector<8x256xf32>
    %c0_1 = arith.constant 0 : index
    %c0_2 = arith.constant 0 : index
    %c0_3 = arith.constant 0 : index
    %1 = vector.load %arg1[%c0_1, %c0_2, %c0_3] : memref<1x4x64xf32, #tpu.memory_space<vmem>>, vector<1x4x64xf32>
    %2 = vector.shape_cast %1 : vector<1x4x64xf32> to vector<4x64xf32>
    %cst = arith.constant dense<0.000000e+00> : vector<64xf32>
    %3 = vector.multi_reduction <add>, %2, %cst [0] : vector<4x64xf32> to vector<64xf32>
    %4 = vector.shape_cast %3 : vector<64xf32> to vector<1x64xf32>
    %c0_4 = arith.constant 0 : index
    %c0_5 = arith.constant 0 : index
    %5 = vector.load %arg3[%c0_4, %c0_5] : memref<64x256xf32, #tpu.memory_space<vmem>>, vector<64x256xf32>
    %cst_6 = arith.constant dense<0.000000e+00> : vector<1x256xf32>
    %6 = tpu.matmul %4, %5, %cst_6 {dimension_numbers = #tpu.dot_dimension_numbers<[1], [0], [0], [1], [0, 0, 1, 1], [], []>} : vector<1x64xf32>, vector<64x256xf32>, vector<1x256xf32> -> vector<1x256xf32>
    %c0_7 = arith.constant 0 : index
    %c0_8 = arith.constant 0 : index
    %c0_9 = arith.constant 0 : index
    %7 = vector.load %arg2[%c0_7, %c0_8, %c0_9] : memref<1x4x256xf32, #tpu.memory_space<vmem>>, vector<1x4x256xf32>
    %8 = vector.shape_cast %7 : vector<1x4x256xf32> to vector<4x256xf32>
    %9 = tpu.concatenate %8, %6 in 0 : vector<4x256xf32>, vector<1x256xf32> -> vector<5x256xf32>
    %c17_i32 = arith.constant 17 : i32
    %10 = tpu.dynamic_rotate %9 by %c17_i32 dim 1 : vector<5x256xf32>, i32 -> vector<5x256xf32>
    %11 = vector.extract_strided_slice %0 {offsets = [0, 0], sizes = [1, 256], strides = [1, 1]} : vector<8x256xf32> to vector<1x256xf32>
    %12 = vector.broadcast %11 : vector<1x256xf32> to vector<5x256xf32>
    %13 = arith.mulf %10, %12 : vector<5x256xf32>
    %c0_10 = arith.constant 0 : index
    %c0_11 = arith.constant 0 : index
    %c0_12 = arith.constant 0 : index
    %14 = vector.load %arg5[%c0_10, %c0_11, %c0_12] : memref<9x8x5xf32, #tpu.memory_space<vmem>>, vector<1x8x5xf32>
    %15 = vector.shape_cast %14 : vector<1x8x5xf32> to vector<8x5xf32>
    %cst_13 = arith.constant dense<0.000000e+00> : vector<8x256xf32>
    %16 = tpu.matmul %15, %13, %cst_13 {dimension_numbers = #tpu.dot_dimension_numbers<[1], [0], [0], [1], [0, 0, 1, 1], [], []>} : vector<8x5xf32>, vector<5x256xf32>, vector<8x256xf32> -> vector<8x256xf32>
    %c16_i32 = arith.constant 16 : i32
    %17 = tpu.dynamic_rotate %9 by %c16_i32 dim 1 : vector<5x256xf32>, i32 -> vector<5x256xf32>
    %18 = vector.extract_strided_slice %0 {offsets = [1, 0], sizes = [1, 256], strides = [1, 1]} : vector<8x256xf32> to vector<1x256xf32>
    %19 = vector.broadcast %18 : vector<1x256xf32> to vector<5x256xf32>
    %20 = arith.mulf %17, %19 : vector<5x256xf32>
    %c1 = arith.constant 1 : index
    %c0_14 = arith.constant 0 : index
    %c0_15 = arith.constant 0 : index
    %21 = vector.load %arg5[%c1, %c0_14, %c0_15] : memref<9x8x5xf32, #tpu.memory_space<vmem>>, vector<1x8x5xf32>
    %22 = vector.shape_cast %21 : vector<1x8x5xf32> to vector<8x5xf32>
    %cst_16 = arith.constant dense<0.000000e+00> : vector<8x256xf32>
    %23 = tpu.matmul %22, %20, %cst_16 {dimension_numbers = #tpu.dot_dimension_numbers<[1], [0], [0], [1], [0, 0, 1, 1], [], []>} : vector<8x5xf32>, vector<5x256xf32>, vector<8x256xf32> -> vector<8x256xf32>
    %24 = arith.addf %16, %23 : vector<8x256xf32>
    %c15_i32 = arith.constant 15 : i32
    %25 = tpu.dynamic_rotate %9 by %c15_i32 dim 1 : vector<5x256xf32>, i32 -> vector<5x256xf32>
    %26 = vector.extract_strided_slice %0 {offsets = [2, 0], sizes = [1, 256], strides = [1, 1]} : vector<8x256xf32> to vector<1x256xf32>
    %27 = vector.broadcast %26 : vector<1x256xf32> to vector<5x256xf32>
    %28 = arith.mulf %25, %27 : vector<5x256xf32>
    %c2 = arith.constant 2 : index
    %c0_17 = arith.constant 0 : index
    %c0_18 = arith.constant 0 : index
    %29 = vector.load %arg5[%c2, %c0_17, %c0_18] : memref<9x8x5xf32, #tpu.memory_space<vmem>>, vector<1x8x5xf32>
    %30 = vector.shape_cast %29 : vector<1x8x5xf32> to vector<8x5xf32>
    %cst_19 = arith.constant dense<0.000000e+00> : vector<8x256xf32>
    %31 = tpu.matmul %30, %28, %cst_19 {dimension_numbers = #tpu.dot_dimension_numbers<[1], [0], [0], [1], [0, 0, 1, 1], [], []>} : vector<8x5xf32>, vector<5x256xf32>, vector<8x256xf32> -> vector<8x256xf32>
    %32 = arith.addf %24, %31 : vector<8x256xf32>
    %c1_i32 = arith.constant 1 : i32
    %33 = tpu.dynamic_rotate %9 by %c1_i32 dim 1 : vector<5x256xf32>, i32 -> vector<5x256xf32>
    %34 = vector.extract_strided_slice %0 {offsets = [3, 0], sizes = [1, 256], strides = [1, 1]} : vector<8x256xf32> to vector<1x256xf32>
    %35 = vector.broadcast %34 : vector<1x256xf32> to vector<5x256xf32>
    %36 = arith.mulf %33, %35 : vector<5x256xf32>
    %c3 = arith.constant 3 : index
    %c0_20 = arith.constant 0 : index
    %c0_21 = arith.constant 0 : index
    %37 = vector.load %arg5[%c3, %c0_20, %c0_21] : memref<9x8x5xf32, #tpu.memory_space<vmem>>, vector<1x8x5xf32>
    %38 = vector.shape_cast %37 : vector<1x8x5xf32> to vector<8x5xf32>
    %cst_22 = arith.constant dense<0.000000e+00> : vector<8x256xf32>
    %39 = tpu.matmul %38, %36, %cst_22 {dimension_numbers = #tpu.dot_dimension_numbers<[1], [0], [0], [1], [0, 0, 1, 1], [], []>} : vector<8x5xf32>, vector<5x256xf32>, vector<8x256xf32> -> vector<8x256xf32>
    %40 = arith.addf %32, %39 : vector<8x256xf32>
    %c4 = arith.constant 4 : index
    %c0_23 = arith.constant 0 : index
    %c0_24 = arith.constant 0 : index
    %41 = vector.load %arg5[%c4, %c0_23, %c0_24] : memref<9x8x5xf32, #tpu.memory_space<vmem>>, vector<1x8x5xf32>
    %42 = vector.shape_cast %41 : vector<1x8x5xf32> to vector<8x5xf32>
    %cst_25 = arith.constant dense<0.000000e+00> : vector<8x256xf32>
    %43 = tpu.matmul %42, %9, %cst_25 {dimension_numbers = #tpu.dot_dimension_numbers<[1], [0], [0], [1], [0, 0, 1, 1], [], []>} : vector<8x5xf32>, vector<5x256xf32>, vector<8x256xf32> -> vector<8x256xf32>
    %44 = arith.addf %40, %43 : vector<8x256xf32>
    %c255_i32 = arith.constant 255 : i32
    %45 = tpu.dynamic_rotate %9 by %c255_i32 dim 1 : vector<5x256xf32>, i32 -> vector<5x256xf32>
    %46 = vector.extract_strided_slice %0 {offsets = [4, 0], sizes = [1, 256], strides = [1, 1]} : vector<8x256xf32> to vector<1x256xf32>
    %47 = vector.broadcast %46 : vector<1x256xf32> to vector<5x256xf32>
    %48 = arith.mulf %45, %47 : vector<5x256xf32>
    %c5 = arith.constant 5 : index
    %c0_26 = arith.constant 0 : index
    %c0_27 = arith.constant 0 : index
    %49 = vector.load %arg5[%c5, %c0_26, %c0_27] : memref<9x8x5xf32, #tpu.memory_space<vmem>>, vector<1x8x5xf32>
    %50 = vector.shape_cast %49 : vector<1x8x5xf32> to vector<8x5xf32>
    %cst_28 = arith.constant dense<0.000000e+00> : vector<8x256xf32>
    %51 = tpu.matmul %50, %48, %cst_28 {dimension_numbers = #tpu.dot_dimension_numbers<[1], [0], [0], [1], [0, 0, 1, 1], [], []>} : vector<8x5xf32>, vector<5x256xf32>, vector<8x256xf32> -> vector<8x256xf32>
    %52 = arith.addf %44, %51 : vector<8x256xf32>
    %c241_i32 = arith.constant 241 : i32
    %53 = tpu.dynamic_rotate %9 by %c241_i32 dim 1 : vector<5x256xf32>, i32 -> vector<5x256xf32>
    %54 = vector.extract_strided_slice %0 {offsets = [5, 0], sizes = [1, 256], strides = [1, 1]} : vector<8x256xf32> to vector<1x256xf32>
    %55 = vector.broadcast %54 : vector<1x256xf32> to vector<5x256xf32>
    %56 = arith.mulf %53, %55 : vector<5x256xf32>
    %c6 = arith.constant 6 : index
    %c0_29 = arith.constant 0 : index
    %c0_30 = arith.constant 0 : index
    %57 = vector.load %arg5[%c6, %c0_29, %c0_30] : memref<9x8x5xf32, #tpu.memory_space<vmem>>, vector<1x8x5xf32>
    %58 = vector.shape_cast %57 : vector<1x8x5xf32> to vector<8x5xf32>
    %cst_31 = arith.constant dense<0.000000e+00> : vector<8x256xf32>
    %59 = tpu.matmul %58, %56, %cst_31 {dimension_numbers = #tpu.dot_dimension_numbers<[1], [0], [0], [1], [0, 0, 1, 1], [], []>} : vector<8x5xf32>, vector<5x256xf32>, vector<8x256xf32> -> vector<8x256xf32>
    %60 = arith.addf %52, %59 : vector<8x256xf32>
    %c240_i32 = arith.constant 240 : i32
    %61 = tpu.dynamic_rotate %9 by %c240_i32 dim 1 : vector<5x256xf32>, i32 -> vector<5x256xf32>
    %62 = vector.extract_strided_slice %0 {offsets = [6, 0], sizes = [1, 256], strides = [1, 1]} : vector<8x256xf32> to vector<1x256xf32>
    %63 = vector.broadcast %62 : vector<1x256xf32> to vector<5x256xf32>
    %64 = arith.mulf %61, %63 : vector<5x256xf32>
    %c7 = arith.constant 7 : index
    %c0_32 = arith.constant 0 : index
    %c0_33 = arith.constant 0 : index
    %65 = vector.load %arg5[%c7, %c0_32, %c0_33] : memref<9x8x5xf32, #tpu.memory_space<vmem>>, vector<1x8x5xf32>
    %66 = vector.shape_cast %65 : vector<1x8x5xf32> to vector<8x5xf32>
    %cst_34 = arith.constant dense<0.000000e+00> : vector<8x256xf32>
    %67 = tpu.matmul %66, %64, %cst_34 {dimension_numbers = #tpu.dot_dimension_numbers<[1], [0], [0], [1], [0, 0, 1, 1], [], []>} : vector<8x5xf32>, vector<5x256xf32>, vector<8x256xf32> -> vector<8x256xf32>
    %68 = arith.addf %60, %67 : vector<8x256xf32>
    %c239_i32 = arith.constant 239 : i32
    %69 = tpu.dynamic_rotate %9 by %c239_i32 dim 1 : vector<5x256xf32>, i32 -> vector<5x256xf32>
    %70 = vector.extract_strided_slice %0 {offsets = [7, 0], sizes = [1, 256], strides = [1, 1]} : vector<8x256xf32> to vector<1x256xf32>
    %71 = vector.broadcast %70 : vector<1x256xf32> to vector<5x256xf32>
    %72 = arith.mulf %69, %71 : vector<5x256xf32>
    %c8 = arith.constant 8 : index
    %c0_35 = arith.constant 0 : index
    %c0_36 = arith.constant 0 : index
    %73 = vector.load %arg5[%c8, %c0_35, %c0_36] : memref<9x8x5xf32, #tpu.memory_space<vmem>>, vector<1x8x5xf32>
    %74 = vector.shape_cast %73 : vector<1x8x5xf32> to vector<8x5xf32>
    %cst_37 = arith.constant dense<0.000000e+00> : vector<8x256xf32>
    %75 = tpu.matmul %74, %72, %cst_37 {dimension_numbers = #tpu.dot_dimension_numbers<[1], [0], [0], [1], [0, 0, 1, 1], [], []>} : vector<8x5xf32>, vector<5x256xf32>, vector<8x256xf32> -> vector<8x256xf32>
    %76 = arith.addf %68, %75 : vector<8x256xf32>
    %c0_38 = arith.constant 0 : index
    %c0_39 = arith.constant 0 : index
    %77 = vector.load %arg6[%c0_38, %c0_39] : memref<8x1xf32, #tpu.memory_space<vmem>>, vector<8x1xf32>
    %78 = vector.broadcast %77 : vector<8x1xf32> to vector<8x256xf32>
    %79 = arith.addf %76, %78 : vector<8x256xf32>
    %cst_40 = arith.constant 0.000000e+00 : f32
    %80 = vector.broadcast %cst_40 : f32 to vector<8x256xf32>
    %81 = arith.maximumf %79, %80 : vector<8x256xf32>
    %c17_i32_41 = arith.constant 17 : i32
    %82 = tpu.dynamic_rotate %81 by %c17_i32_41 dim 1 : vector<8x256xf32>, i32 -> vector<8x256xf32>
    %83 = vector.extract_strided_slice %0 {offsets = [0, 0], sizes = [1, 256], strides = [1, 1]} : vector<8x256xf32> to vector<1x256xf32>
    %84 = vector.broadcast %83 : vector<1x256xf32> to vector<8x256xf32>
    %85 = arith.mulf %82, %84 : vector<8x256xf32>
    %c0_42 = arith.constant 0 : index
    %c0_43 = arith.constant 0 : index
    %c0_44 = arith.constant 0 : index
    %86 = vector.load %arg7[%c0_42, %c0_43, %c0_44] : memref<9x8x8xf32, #tpu.memory_space<vmem>>, vector<1x8x8xf32>
    %87 = vector.shape_cast %86 : vector<1x8x8xf32> to vector<8x8xf32>
    %cst_45 = arith.constant dense<0.000000e+00> : vector<8x256xf32>
    %88 = tpu.matmul %87, %85, %cst_45 {dimension_numbers = #tpu.dot_dimension_numbers<[1], [0], [0], [1], [0, 0, 1, 1], [], []>} : vector<8x8xf32>, vector<8x256xf32>, vector<8x256xf32> -> vector<8x256xf32>
    %c16_i32_46 = arith.constant 16 : i32
    %89 = tpu.dynamic_rotate %81 by %c16_i32_46 dim 1 : vector<8x256xf32>, i32 -> vector<8x256xf32>
    %90 = vector.extract_strided_slice %0 {offsets = [1, 0], sizes = [1, 256], strides = [1, 1]} : vector<8x256xf32> to vector<1x256xf32>
    %91 = vector.broadcast %90 : vector<1x256xf32> to vector<8x256xf32>
    %92 = arith.mulf %89, %91 : vector<8x256xf32>
    %c1_47 = arith.constant 1 : index
    %c0_48 = arith.constant 0 : index
    %c0_49 = arith.constant 0 : index
    %93 = vector.load %arg7[%c1_47, %c0_48, %c0_49] : memref<9x8x8xf32, #tpu.memory_space<vmem>>, vector<1x8x8xf32>
    %94 = vector.shape_cast %93 : vector<1x8x8xf32> to vector<8x8xf32>
    %cst_50 = arith.constant dense<0.000000e+00> : vector<8x256xf32>
    %95 = tpu.matmul %94, %92, %cst_50 {dimension_numbers = #tpu.dot_dimension_numbers<[1], [0], [0], [1], [0, 0, 1, 1], [], []>} : vector<8x8xf32>, vector<8x256xf32>, vector<8x256xf32> -> vector<8x256xf32>
    %96 = arith.addf %88, %95 : vector<8x256xf32>
    %c15_i32_51 = arith.constant 15 : i32
    %97 = tpu.dynamic_rotate %81 by %c15_i32_51 dim 1 : vector<8x256xf32>, i32 -> vector<8x256xf32>
    %98 = vector.extract_strided_slice %0 {offsets = [2, 0], sizes = [1, 256], strides = [1, 1]} : vector<8x256xf32> to vector<1x256xf32>
    %99 = vector.broadcast %98 : vector<1x256xf32> to vector<8x256xf32>
    %100 = arith.mulf %97, %99 : vector<8x256xf32>
    %c2_52 = arith.constant 2 : index
    %c0_53 = arith.constant 0 : index
    %c0_54 = arith.constant 0 : index
    %101 = vector.load %arg7[%c2_52, %c0_53, %c0_54] : memref<9x8x8xf32, #tpu.memory_space<vmem>>, vector<1x8x8xf32>
    %102 = vector.shape_cast %101 : vector<1x8x8xf32> to vector<8x8xf32>
    %cst_55 = arith.constant dense<0.000000e+00> : vector<8x256xf32>
    %103 = tpu.matmul %102, %100, %cst_55 {dimension_numbers = #tpu.dot_dimension_numbers<[1], [0], [0], [1], [0, 0, 1, 1], [], []>} : vector<8x8xf32>, vector<8x256xf32>, vector<8x256xf32> -> vector<8x256xf32>
    %104 = arith.addf %96, %103 : vector<8x256xf32>
    %c1_i32_56 = arith.constant 1 : i32
    %105 = tpu.dynamic_rotate %81 by %c1_i32_56 dim 1 : vector<8x256xf32>, i32 -> vector<8x256xf32>
    %106 = vector.extract_strided_slice %0 {offsets = [3, 0], sizes = [1, 256], strides = [1, 1]} : vector<8x256xf32> to vector<1x256xf32>
    %107 = vector.broadcast %106 : vector<1x256xf32> to vector<8x256xf32>
    %108 = arith.mulf %105, %107 : vector<8x256xf32>
    %c3_57 = arith.constant 3 : index
    %c0_58 = arith.constant 0 : index
    %c0_59 = arith.constant 0 : index
    %109 = vector.load %arg7[%c3_57, %c0_58, %c0_59] : memref<9x8x8xf32, #tpu.memory_space<vmem>>, vector<1x8x8xf32>
    %110 = vector.shape_cast %109 : vector<1x8x8xf32> to vector<8x8xf32>
    %cst_60 = arith.constant dense<0.000000e+00> : vector<8x256xf32>
    %111 = tpu.matmul %110, %108, %cst_60 {dimension_numbers = #tpu.dot_dimension_numbers<[1], [0], [0], [1], [0, 0, 1, 1], [], []>} : vector<8x8xf32>, vector<8x256xf32>, vector<8x256xf32> -> vector<8x256xf32>
    %112 = arith.addf %104, %111 : vector<8x256xf32>
    %c4_61 = arith.constant 4 : index
    %c0_62 = arith.constant 0 : index
    %c0_63 = arith.constant 0 : index
    %113 = vector.load %arg7[%c4_61, %c0_62, %c0_63] : memref<9x8x8xf32, #tpu.memory_space<vmem>>, vector<1x8x8xf32>
    %114 = vector.shape_cast %113 : vector<1x8x8xf32> to vector<8x8xf32>
    %cst_64 = arith.constant dense<0.000000e+00> : vector<8x256xf32>
    %115 = tpu.matmul %114, %81, %cst_64 {dimension_numbers = #tpu.dot_dimension_numbers<[1], [0], [0], [1], [0, 0, 1, 1], [], []>} : vector<8x8xf32>, vector<8x256xf32>, vector<8x256xf32> -> vector<8x256xf32>
    %116 = arith.addf %112, %115 : vector<8x256xf32>
    %c255_i32_65 = arith.constant 255 : i32
    %117 = tpu.dynamic_rotate %81 by %c255_i32_65 dim 1 : vector<8x256xf32>, i32 -> vector<8x256xf32>
    %118 = vector.extract_strided_slice %0 {offsets = [4, 0], sizes = [1, 256], strides = [1, 1]} : vector<8x256xf32> to vector<1x256xf32>
    %119 = vector.broadcast %118 : vector<1x256xf32> to vector<8x256xf32>
    %120 = arith.mulf %117, %119 : vector<8x256xf32>
    %c5_66 = arith.constant 5 : index
    %c0_67 = arith.constant 0 : index
    %c0_68 = arith.constant 0 : index
    %121 = vector.load %arg7[%c5_66, %c0_67, %c0_68] : memref<9x8x8xf32, #tpu.memory_space<vmem>>, vector<1x8x8xf32>
    %122 = vector.shape_cast %121 : vector<1x8x8xf32> to vector<8x8xf32>
    %cst_69 = arith.constant dense<0.000000e+00> : vector<8x256xf32>
    %123 = tpu.matmul %122, %120, %cst_69 {dimension_numbers = #tpu.dot_dimension_numbers<[1], [0], [0], [1], [0, 0, 1, 1], [], []>} : vector<8x8xf32>, vector<8x256xf32>, vector<8x256xf32> -> vector<8x256xf32>
    %124 = arith.addf %116, %123 : vector<8x256xf32>
    %c241_i32_70 = arith.constant 241 : i32
    %125 = tpu.dynamic_rotate %81 by %c241_i32_70 dim 1 : vector<8x256xf32>, i32 -> vector<8x256xf32>
    %126 = vector.extract_strided_slice %0 {offsets = [5, 0], sizes = [1, 256], strides = [1, 1]} : vector<8x256xf32> to vector<1x256xf32>
    %127 = vector.broadcast %126 : vector<1x256xf32> to vector<8x256xf32>
    %128 = arith.mulf %125, %127 : vector<8x256xf32>
    %c6_71 = arith.constant 6 : index
    %c0_72 = arith.constant 0 : index
    %c0_73 = arith.constant 0 : index
    %129 = vector.load %arg7[%c6_71, %c0_72, %c0_73] : memref<9x8x8xf32, #tpu.memory_space<vmem>>, vector<1x8x8xf32>
    %130 = vector.shape_cast %129 : vector<1x8x8xf32> to vector<8x8xf32>
    %cst_74 = arith.constant dense<0.000000e+00> : vector<8x256xf32>
    %131 = tpu.matmul %130, %128, %cst_74 {dimension_numbers = #tpu.dot_dimension_numbers<[1], [0], [0], [1], [0, 0, 1, 1], [], []>} : vector<8x8xf32>, vector<8x256xf32>, vector<8x256xf32> -> vector<8x256xf32>
    %132 = arith.addf %124, %131 : vector<8x256xf32>
    %c240_i32_75 = arith.constant 240 : i32
    %133 = tpu.dynamic_rotate %81 by %c240_i32_75 dim 1 : vector<8x256xf32>, i32 -> vector<8x256xf32>
    %134 = vector.extract_strided_slice %0 {offsets = [6, 0], sizes = [1, 256], strides = [1, 1]} : vector<8x256xf32> to vector<1x256xf32>
    %135 = vector.broadcast %134 : vector<1x256xf32> to vector<8x256xf32>
    %136 = arith.mulf %133, %135 : vector<8x256xf32>
    %c7_76 = arith.constant 7 : index
    %c0_77 = arith.constant 0 : index
    %c0_78 = arith.constant 0 : index
    %137 = vector.load %arg7[%c7_76, %c0_77, %c0_78] : memref<9x8x8xf32, #tpu.memory_space<vmem>>, vector<1x8x8xf32>
    %138 = vector.shape_cast %137 : vector<1x8x8xf32> to vector<8x8xf32>
    %cst_79 = arith.constant dense<0.000000e+00> : vector<8x256xf32>
    %139 = tpu.matmul %138, %136, %cst_79 {dimension_numbers = #tpu.dot_dimension_numbers<[1], [0], [0], [1], [0, 0, 1, 1], [], []>} : vector<8x8xf32>, vector<8x256xf32>, vector<8x256xf32> -> vector<8x256xf32>
    %140 = arith.addf %132, %139 : vector<8x256xf32>
    %c239_i32_80 = arith.constant 239 : i32
    %141 = tpu.dynamic_rotate %81 by %c239_i32_80 dim 1 : vector<8x256xf32>, i32 -> vector<8x256xf32>
    %142 = vector.extract_strided_slice %0 {offsets = [7, 0], sizes = [1, 256], strides = [1, 1]} : vector<8x256xf32> to vector<1x256xf32>
    %143 = vector.broadcast %142 : vector<1x256xf32> to vector<8x256xf32>
    %144 = arith.mulf %141, %143 : vector<8x256xf32>
    %c8_81 = arith.constant 8 : index
    %c0_82 = arith.constant 0 : index
    %c0_83 = arith.constant 0 : index
    %145 = vector.load %arg7[%c8_81, %c0_82, %c0_83] : memref<9x8x8xf32, #tpu.memory_space<vmem>>, vector<1x8x8xf32>
    %146 = vector.shape_cast %145 : vector<1x8x8xf32> to vector<8x8xf32>
    %cst_84 = arith.constant dense<0.000000e+00> : vector<8x256xf32>
    %147 = tpu.matmul %146, %144, %cst_84 {dimension_numbers = #tpu.dot_dimension_numbers<[1], [0], [0], [1], [0, 0, 1, 1], [], []>} : vector<8x8xf32>, vector<8x256xf32>, vector<8x256xf32> -> vector<8x256xf32>
    %148 = arith.addf %140, %147 : vector<8x256xf32>
    %c0_85 = arith.constant 0 : index
    %c0_86 = arith.constant 0 : index
    %149 = vector.load %arg8[%c0_85, %c0_86] : memref<8x1xf32, #tpu.memory_space<vmem>>, vector<8x1xf32>
    %150 = vector.broadcast %149 : vector<8x1xf32> to vector<8x256xf32>
    %151 = arith.addf %148, %150 : vector<8x256xf32>
    %cst_87 = arith.constant 0.000000e+00 : f32
    %152 = vector.broadcast %cst_87 : f32 to vector<8x256xf32>
    %153 = arith.maximumf %151, %152 : vector<8x256xf32>
    %c0_88 = arith.constant 0 : index
    %c0_89 = arith.constant 0 : index
    %c0_90 = arith.constant 0 : index
    %154 = vector.load %arg9[%c0_88, %c0_89, %c0_90] : memref<1x8x256xf32, #tpu.memory_space<vmem>>, vector<1x8x256xf32>
    %155 = vector.shape_cast %154 : vector<1x8x256xf32> to vector<8x256xf32>
    %156 = vector.shape_cast %153 : vector<8x256xf32> to vector<1x8x256xf32>
    tpu.vector_store %arg9[%c0_88, %c0_89, %c0_90], %156 {strides = array<i32>} : memref<1x8x256xf32, #tpu.memory_space<vmem>>, vector<1x8x256xf32>,
    return
  }
  func.func @transform_0(%arg0: i32) -> (i32, i32, i32) {
    %c0_i32 = arith.constant 0 : i32
    %c0_i32_0 = arith.constant 0 : i32
    %c0_i32_1 = arith.constant 0 : i32
    return %arg0, %c0_i32, %c0_i32_0 : i32, i32, i32
  }
  func.func @transform_1(%arg0: i32) -> (i32, i32, i32) {
    %c0_i32 = arith.constant 0 : i32
    %c0_i32_0 = arith.constant 0 : i32
    %c0_i32_1 = arith.constant 0 : i32
    return %arg0, %c0_i32, %c0_i32_0 : i32, i32, i32
  }
  func.func @transform_2(%arg0: i32) -> (i32, i32) {
    %c0_i32 = arith.constant 0 : i32
    %c0_i32_0 = arith.constant 0 : i32
    %c0_i32_1 = arith.constant 0 : i32
    return %c0_i32, %c0_i32_0 : i32, i32
  }
  func.func @transform_3(%arg0: i32) -> (i32, i32) {
    %c0_i32 = arith.constant 0 : i32
    %c0_i32_0 = arith.constant 0 : i32
    %c0_i32_1 = arith.constant 0 : i32
    return %c0_i32, %c0_i32_0 : i32, i32
  }
  func.func @transform_4(%arg0: i32) -> (i32, i32, i32) {
    %c0_i32 = arith.constant 0 : i32
    %c0_i32_0 = arith.constant 0 : i32
    %c0_i32_1 = arith.constant 0 : i32
    %c0_i32_2 = arith.constant 0 : i32
    return %c0_i32, %c0_i32_0, %c0_i32_1 : i32, i32, i32
  }
  func.func @transform_5(%arg0: i32) -> (i32, i32) {
    %c0_i32 = arith.constant 0 : i32
    %c0_i32_0 = arith.constant 0 : i32
    %c0_i32_1 = arith.constant 0 : i32
    return %c0_i32, %c0_i32_0 : i32, i32
  }
  func.func @transform_6(%arg0: i32) -> (i32, i32, i32) {
    %c0_i32 = arith.constant 0 : i32
    %c0_i32_0 = arith.constant 0 : i32
    %c0_i32_1 = arith.constant 0 : i32
    %c0_i32_2 = arith.constant 0 : i32
    return %c0_i32, %c0_i32_0, %c0_i32_1 : i32, i32, i32
  }
  func.func @transform_7(%arg0: i32) -> (i32, i32) {
    %c0_i32 = arith.constant 0 : i32
    %c0_i32_0 = arith.constant 0 : i32
    %c0_i32_1 = arith.constant 0 : i32
    return %c0_i32, %c0_i32_0 : i32, i32
  }
  func.func @transform_8(%arg0: i32) -> (i32, i32, i32) {
    %c0_i32 = arith.constant 0 : i32
    %c0_i32_0 = arith.constant 0 : i32
    %c0_i32_1 = arith.constant 0 : i32
    return %arg0, %c0_i32, %c0_i32_0 : i32, i32, i32
  }
}

</mosaic_0001>

<llo_original>
// kernel: tpu_custom_call.1
$region0: #{tpu_custom_call.1}
  #allocation0 [shape = 'u32[]', space=smem, size = 0x4, offset = 0x4, fixed_abs, tag = 'smem constant byte address 0x4 - core index']
  #allocation1 [shape = 'u32[144,128]{1,0:T(1,128)}', space=vmem, size = 0x12000, scoped, tag = 'internal scratch']
  %s0 = inlined_call_operand.vmem [shape: f32[2,4,64], index: 0, kind: input, shape index: {}]
  %s1 = inlined_call_operand.vmem [shape: f32[2,4,256], index: 1, kind: input, shape index: {}]
  %s2 = inlined_call_operand.vmem [shape: f32[64,256], index: 2, kind: input, shape index: {}]
  %s3 = inlined_call_operand.vmem [shape: f32[8,256], index: 3, kind: input, shape index: {}]
  %s4 = inlined_call_operand.vmem [shape: f32[9,8,5], index: 4, kind: input, shape index: {}]
  %s5 = inlined_call_operand.vmem [shape: f32[8,1], index: 5, kind: input, shape index: {}]
  %s6 = inlined_call_operand.vmem [shape: f32[9,8,8], index: 6, kind: input, shape index: {}]
  %s7 = inlined_call_operand.vmem [shape: f32[8,1], index: 7, kind: input, shape index: {}]
  %s8 = inlined_call_operand.hbm [shape: f32[2,8,256], index: 8, kind: output, shape index: {}]
  %s9 = sld [smem:[#allocation0]]
  $region65: #{tpu_custom_call.1} parent=0
    _
  %s11 = ssub.s32 1, %s9
  %s12 = scalar_select 0, %s11, %s9
  $region1: #{tpu_custom_call.1} parent=0
    #allocation2 [shape = 'u8[16384]{0}', space=vmem, size = 0x4000, scoped, tag = 'output window, operand 0']
    #allocation3 [shape = 's32[2]{0}', space=sflag, size = 0x8, scoped, tag = 'scoped memory for tpu_custom_call.1']
    %13 = vsyncpa [#allocation3], 0
    %s14 = scalar_lea.sflag [#allocation3], 1
    %15 = vsyncpa %s14, 0
    loop: start=0, step=1, limit=4
    $region2: #{tpu_custom_call.1} parent=1 // loop_pre_header
      _
    $region3: #{tpu_custom_call.1} parent=1 // loop_header
      %s17 = sphi 0, %s21
      %p18 = scmp.ge.s32.totalorder %s17, 4
      %s27 = sphi 0, %s29
      %s30 = sphi 0, %s27
      %s31 = sphi 0, %s30
      %s47 = sphi 0, %s31
      %s53 = sphi 0, %s55
      %s56 = sphi 0, %s53
      %s57 = sphi 0, %s56
      %s73 = sphi 0, %s57
      %s77 = sphi 0, %s77
      %s79 = sphi 0, %s77
      %s80 = sphi 0, %s79
      %s94 = sphi 0, %s80
      %s98 = sphi 0, %s98
      %s100 = sphi 0, %s98
      %s101 = sphi 0, %s100
      %s115 = sphi 0, %s101
      %s119 = sphi 0, %s119
      %s121 = sphi 0, %s119
      %s122 = sphi 0, %s121
      %s136 = sphi 0, %s122
      %s140 = sphi 0, %s140
      %s142 = sphi 0, %s140
      %s143 = sphi 0, %s142
      %s157 = sphi 0, %s143
      %s161 = sphi 0, %s161
      %s163 = sphi 0, %s161
      %s164 = sphi 0, %s163
      %s178 = sphi 0, %s164
      %s182 = sphi 0, %s182
      %s184 = sphi 0, %s182
      %s185 = sphi 0, %s184
      %s199 = sphi 0, %s185
      %s205 = sphi 0, %s207
      %s208 = sphi 0, %s205
      %s209 = sphi 0, %s208
      %s225 = sphi 0, %s209
    $region4: #{tpu_custom_call.1} parent=1 // loop_header_branch
      %20 = sbr.rel (%p18) target = $region8
    $region5: #{tpu_custom_call.1} parent=1 // loop_body
      %s22 = ssub.s32 %s17, 1
      %s23 = ssub.s32 %s17, 2
      %s24 = sadd.s32 %s17, 1
      %s25 = ssub.s32 %s17, %s24
      %p26 = scmp.eq.s32.totalorder %s25, 0
      %s28 = sadd.s32 %s27, 1
      %s29 = scalar_select %p26, %s27, %s28
      %p32 = pneg %p26
      %p33 = scmp.eq.s32.totalorder %s17, 1
      %p34 = por %p32, %p33
      %p35 = scmp.ne.s32.totalorder %s27, %s30
      %p36 = scmp.eq.s32.totalorder %s17, 0
      %p37 = por %p35, %p36
      %p38 = scmp.ne.s32.totalorder %s27, %s30
      %p39 = scmp.eq.s32.totalorder %s22, 1
      %p40 = por %p38, %p39
      %p41 = scmp.ne.s32.totalorder %s30, %s31
      %p42 = scmp.eq.s32.totalorder %s22, 0
      %p43 = por %p41, %p42
      %p44 = scmp.ne.s32.totalorder %s30, %s31
      %p45 = scmp.eq.s32.totalorder %s23, 1
      %p46 = por %p44, %p45
      %p48 = scmp.ne.s32.totalorder %s31, %s47
      %p49 = scmp.eq.s32.totalorder %s23, 0
      %p50 = por %p48, %p49
      %s51 = ssub.s32 %s17, %s24
      %p52 = scmp.eq.s32.totalorder %s51, 0
      %s54 = sadd.s32 %s53, 1
      %s55 = scalar_select %p52, %s53, %s54
      %p58 = pneg %p52
      %p59 = scmp.eq.s32.totalorder %s17, 1
      %p60 = por %p58, %p59
      %p61 = scmp.ne.s32.totalorder %s53, %s56
      %p62 = scmp.eq.s32.totalorder %s17, 0
      %p63 = por %p61, %p62
      %p64 = scmp.ne.s32.totalorder %s53, %s56
      %p65 = scmp.eq.s32.totalorder %s22, 1
      %p66 = por %p64, %p65
      %p67 = scmp.ne.s32.totalorder %s56, %s57
      %p68 = scmp.eq.s32.totalorder %s22, 0
      %p69 = por %p67, %p68
      %p70 = scmp.ne.s32.totalorder %s56, %s57
      %p71 = scmp.eq.s32.totalorder %s23, 1
      %p72 = por %p70, %p71
      %p74 = scmp.ne.s32.totalorder %s57, %s73
      %p75 = scmp.eq.s32.totalorder %s23, 0
      %p76 = por %p74, %p75
      %s78 = sadd.s32 %s77, 1
      %p81 = scmp.eq.s32.totalorder %s17, 1
      %p82 = scmp.ne.s32.totalorder %s77, %s79
      %p83 = scmp.eq.s32.totalorder %s17, 0
      %p84 = por %p82, %p83
      %p85 = scmp.ne.s32.totalorder %s77, %s79
      %p86 = scmp.eq.s32.totalorder %s22, 1
      %p87 = por %p85, %p86
      %p88 = scmp.ne.s32.totalorder %s79, %s80
      %p89 = scmp.eq.s32.totalorder %s22, 0
      %p90 = por %p88, %p89
      %p91 = scmp.ne.s32.totalorder %s79, %s80
      %p92 = scmp.eq.s32.totalorder %s23, 1
      %p93 = por %p91, %p92
      %p95 = scmp.ne.s32.totalorder %s80, %s94
      %p96 = scmp.eq.s32.totalorder %s23, 0
      %p97 = por %p95, %p96
      %s99 = sadd.s32 %s98, 1
      %p102 = scmp.eq.s32.totalorder %s17, 1
      %p103 = scmp.ne.s32.totalorder %s98, %s100
      %p104 = scmp.eq.s32.totalorder %s17, 0
      %p105 = por %p103, %p104
      %p106 = scmp.ne.s32.totalorder %s98, %s100
      %p107 = scmp.eq.s32.totalorder %s22, 1
      %p108 = por %p106, %p107
      %p109 = scmp.ne.s32.totalorder %s100, %s101
      %p110 = scmp.eq.s32.totalorder %s22, 0
      %p111 = por %p109, %p110
      %p112 = scmp.ne.s32.totalorder %s100, %s101
      %p113 = scmp.eq.s32.totalorder %s23, 1
      %p114 = por %p112, %p113
      %p116 = scmp.ne.s32.totalorder %s101, %s115
      %p117 = scmp.eq.s32.totalorder %s23, 0
      %p118 = por %p116, %p117
      %s120 = sadd.s32 %s119, 1
      %p123 = scmp.eq.s32.totalorder %s17, 1
      %p124 = scmp.ne.s32.totalorder %s119, %s121
      %p125 = scmp.eq.s32.totalorder %s17, 0
      %p126 = por %p124, %p125
      %p127 = scmp.ne.s32.totalorder %s119, %s121
      %p128 = scmp.eq.s32.totalorder %s22, 1
      %p129 = por %p127, %p128
      %p130 = scmp.ne.s32.totalorder %s121, %s122
      %p131 = scmp.eq.s32.totalorder %s22, 0
      %p132 = por %p130, %p131
      %p133 = scmp.ne.s32.totalorder %s121, %s122
      %p134 = scmp.eq.s32.totalorder %s23, 1
      %p135 = por %p133, %p134
      %p137 = scmp.ne.s32.totalorder %s122, %s136
      %p138 = scmp.eq.s32.totalorder %s23, 0
      %p139 = por %p137, %p138
      %s141 = sadd.s32 %s140, 1
      %p144 = scmp.eq.s32.totalorder %s17, 1
      %p145 = scmp.ne.s32.totalorder %s140, %s142
      %p146 = scmp.eq.s32.totalorder %s17, 0
      %p147 = por %p145, %p146
      %p148 = scmp.ne.s32.totalorder %s140, %s142
      %p149 = scmp.eq.s32.totalorder %s22, 1
      %p150 = por %p148, %p149
      %p151 = scmp.ne.s32.totalorder %s142, %s143
      %p152 = scmp.eq.s32.totalorder %s22, 0
      %p153 = por %p151, %p152
      %p154 = scmp.ne.s32.totalorder %s142, %s143
      %p155 = scmp.eq.s32.totalorder %s23, 1
      %p156 = por %p154, %p155
      %p158 = scmp.ne.s32.totalorder %s143, %s157
      %p159 = scmp.eq.s32.totalorder %s23, 0
      %p160 = por %p158, %p159
      %s162 = sadd.s32 %s161, 1
      %p165 = scmp.eq.s32.totalorder %s17, 1
      %p166 = scmp.ne.s32.totalorder %s161, %s163
      %p167 = scmp.eq.s32.totalorder %s17, 0
      %p168 = por %p166, %p167
      %p169 = scmp.ne.s32.totalorder %s161, %s163
      %p170 = scmp.eq.s32.totalorder %s22, 1
      %p171 = por %p169, %p170
      %p172 = scmp.ne.s32.totalorder %s163, %s164
      %p173 = scmp.eq.s32.totalorder %s22, 0
      %p174 = por %p172, %p173
      %p175 = scmp.ne.s32.totalorder %s163, %s164
      %p176 = scmp.eq.s32.totalorder %s23, 1
      %p177 = por %p175, %p176
      %p179 = scmp.ne.s32.totalorder %s164, %s178
      %p180 = scmp.eq.s32.totalorder %s23, 0
      %p181 = por %p179, %p180
      %s183 = sadd.s32 %s182, 1
      %p186 = scmp.eq.s32.totalorder %s17, 1
      %p187 = scmp.ne.s32.totalorder %s182, %s184
      %p188 = scmp.eq.s32.totalorder %s17, 0
      %p189 = por %p187, %p188
      %p190 = scmp.ne.s32.totalorder %s182, %s184
      %p191 = scmp.eq.s32.totalorder %s22, 1
      %p192 = por %p190, %p191
      %p193 = scmp.ne.s32.totalorder %s184, %s185
      %p194 = scmp.eq.s32.totalorder %s22, 0
      %p195 = por %p193, %p194
      %p196 = scmp.ne.s32.totalorder %s184, %s185
      %p197 = scmp.eq.s32.totalorder %s23, 1
      %p198 = por %p196, %p197
      %p200 = scmp.ne.s32.totalorder %s185, %s199
      %p201 = scmp.eq.s32.totalorder %s23, 0
      %p202 = por %p200, %p201
      %s203 = ssub.s32 %s17, %s24
      %p204 = scmp.eq.s32.totalorder %s203, 0
      %s206 = sadd.s32 %s205, 1
      %s207 = scalar_select %p204, %s205, %s206
      %p210 = pneg %p204
      %p211 = scmp.eq.s32.totalorder %s17, 1
      %p212 = por %p210, %p211
      %p213 = scmp.ne.s32.totalorder %s205, %s208
      %p214 = scmp.eq.s32.totalorder %s17, 0
      %p215 = por %p213, %p214
      %p216 = scmp.ne.s32.totalorder %s205, %s208
      %p217 = scmp.eq.s32.totalorder %s22, 1
      %p218 = por %p216, %p217
      %p219 = scmp.ne.s32.totalorder %s208, %s209
      %p220 = scmp.eq.s32.totalorder %s22, 0
      %p221 = por %p219, %p220
      %p222 = scmp.ne.s32.totalorder %s208, %s209
      %p223 = scmp.eq.s32.totalorder %s23, 1
      %p224 = por %p222, %p223
      %p226 = scmp.ne.s32.totalorder %s209, %s225
      %p227 = scmp.eq.s32.totalorder %s23, 0
      %p228 = por %p226, %p227
      %p229 = scmp.le.s32.totalorder 1, %s17
      %p230 = scmp.lt.s32.totalorder %s17, 3
      %p231 = pnand %p229, %p230
      %p232 = pneg %p231
      // Predicated region
      $region9: #{tpu_custom_call.1} parent=5 // pred_check
        _
      $region10: #{tpu_custom_call.1} parent=5 // pred_check_branch
        %234 = sbr.rel (%p231) target = $region12
      $region11: #{tpu_custom_call.1} parent=5 // pred_region
        %s235 = ssub.s32 %s17, 1
        // Predicated region
        $region13: #{tpu_custom_call.1} parent=11 // pred_check
          %p236 = pneg %p90
        $region14: #{tpu_custom_call.1} parent=11 // pred_check_branch
          %238 = sbr.rel (%p236) target = $region16
        $region15: #{tpu_custom_call.1} parent=11 // pred_region
          _
        $region16: #{tpu_custom_call.1} parent=11 // pred_fallthru
          _
        // Predicated region
        $region17: #{tpu_custom_call.1} parent=11 // pred_check
          %p239 = pneg %p111
        $region18: #{tpu_custom_call.1} parent=11 // pred_check_branch
          %241 = sbr.rel (%p239) target = $region20
        $region19: #{tpu_custom_call.1} parent=11 // pred_region
          _
        $region20: #{tpu_custom_call.1} parent=11 // pred_fallthru
          _
        // Predicated region
        $region21: #{tpu_custom_call.1} parent=11 // pred_check
          %p242 = pneg %p132
        $region22: #{tpu_custom_call.1} parent=11 // pred_check_branch
          %244 = sbr.rel (%p242) target = $region24
        $region23: #{tpu_custom_call.1} parent=11 // pred_region
          _
        $region24: #{tpu_custom_call.1} parent=11 // pred_fallthru
          _
        // Predicated region
        $region25: #{tpu_custom_call.1} parent=11 // pred_check
          %p245 = pneg %p153
        $region26: #{tpu_custom_call.1} parent=11 // pred_check_branch
          %247 = sbr.rel (%p245) target = $region28
        $region27: #{tpu_custom_call.1} parent=11 // pred_region
          _
        $region28: #{tpu_custom_call.1} parent=11 // pred_fallthru
          _
        // Predicated region
        $region29: #{tpu_custom_call.1} parent=11 // pred_check
          %p248 = pneg %p174
        $region30: #{tpu_custom_call.1} parent=11 // pred_check_branch
          %250 = sbr.rel (%p248) target = $region32
        $region31: #{tpu_custom_call.1} parent=11 // pred_region
          _
        $region32: #{tpu_custom_call.1} parent=11 // pred_fallthru
          _
        // Predicated region
        $region33: #{tpu_custom_call.1} parent=11 // pred_check
          %p251 = pneg %p195
        $region34: #{tpu_custom_call.1} parent=11 // pred_check_branch
          %253 = sbr.rel (%p251) target = $region36
        $region35: #{tpu_custom_call.1} parent=11 // pred_region
          _
        $region36: #{tpu_custom_call.1} parent=11 // pred_fallthru
          _
      $region12: #{tpu_custom_call.1} parent=5 // pred_fallthru
        _
      %p254 = scmp.lt.s32.totalorder %s17, 2
      // Predicated region
      $region37: #{tpu_custom_call.1} parent=5 // pred_check
        %p255 = pneg %p254
      $region38: #{tpu_custom_call.1} parent=5 // pred_check_branch
        %257 = sbr.rel (%p255) target = $region40
      $region39: #{tpu_custom_call.1} parent=5 // pred_region
        // Predicated region
        $region41: #{tpu_custom_call.1} parent=39 // pred_check
          %p258 = pneg %p37
        $region42: #{tpu_custom_call.1} parent=39 // pred_check_branch
          %260 = sbr.rel (%p258) target = $region44
        $region43: #{tpu_custom_call.1} parent=39 // pred_region
          %p261 = scmp.lt.s32.totalorder %s17, 1
          %s262 = scalar_select %p261, %s17, 1
          %s263 = smul.addr %s262, 4
          %s264 = scalar_lea.vmem %s0, %s263
        $region44: #{tpu_custom_call.1} parent=39 // pred_fallthru
          _
        // Predicated region
        $region45: #{tpu_custom_call.1} parent=39 // pred_check
          %p265 = pneg %p63
        $region46: #{tpu_custom_call.1} parent=39 // pred_check_branch
          %267 = sbr.rel (%p265) target = $region48
        $region47: #{tpu_custom_call.1} parent=39 // pred_region
          %p268 = scmp.lt.s32.totalorder %s17, 1
          %s269 = scalar_select %p268, %s17, 1
          %s270 = smul.addr %s269, 2
          %s271 = smul.addr %s270, 4
          %s272 = scalar_lea.vmem %s1, %s271
        $region48: #{tpu_custom_call.1} parent=39 // pred_fallthru
          _
      $region40: #{tpu_custom_call.1} parent=5 // pred_fallthru
        _
      %p273 = scmp.le.s32.totalorder 1, %s17
      %p274 = scmp.lt.s32.totalorder %s17, 3
      %p275 = pnand %p273, %p274
      %p276 = pneg %p275
      // Predicated region
      $region49: #{tpu_custom_call.1} parent=5 // pred_check
        _
      $region50: #{tpu_custom_call.1} parent=5 // pred_check_branch
        %278 = sbr.rel (%p275) target = $region52
      $region51: #{tpu_custom_call.1} parent=5 // pred_region
        %s279 = ssub.s32 %s17, 1
        %p280 = scmp.lt.s32.totalorder %s22, 1
        %s281 = scalar_select %p280, %s22, 1
        %s282 = smul.addr %s281, 4
        %s283 = scalar_lea.vmem %s0, %s282
        %p284 = pneg %p43
        %p285 = pneg %p40
        %p286 = scmp.lt.s32.totalorder %s22, 1
        %s287 = scalar_select %p286, %s22, 1
        %s288 = smul.addr %s287, 2
        %s289 = smul.addr %s288, 4
        %s290 = scalar_lea.vmem %s1, %s289
        %p291 = pneg %p69
        %p292 = pneg %p66
        %p293 = pneg %p90
        %p294 = pneg %p87
        %p295 = pneg %p111
        %p296 = pneg %p108
        %p297 = pneg %p132
        %p298 = pneg %p129
        %p299 = pneg %p153
        %p300 = pneg %p150
        %p301 = pneg %p174
        %p302 = pneg %p171
        %p303 = pneg %p195
        %p304 = pneg %p192
        %p305 = pneg %p221
        %p306 = pneg %p218
        %s307 = sand.u32 %s208, 1
        %s308 = scalar_lea.sflag [#allocation3], %s307
        %s309 = sand.u32 %s208, 1
        %s310 = smul.addr %s309, 16
        %s311 = scalar_lea.vmem [#allocation2], %s310
        %p312 = scmp.lt.s32.totalorder %s22, 1
        %s313 = scalar_select %p312, %s22, 1
        %s314 = smul.addr %s313, 4
        %s315 = scalar_lea.vmem %s0, %s314
        %p316 = scmp.lt.s32.totalorder %s22, 1
        %s317 = scalar_select %p316, %s22, 1
        %s318 = smul.addr %s317, 2
        %s319 = smul.addr %s318, 4
        %s320 = scalar_lea.vmem %s1, %s319
        %v321 = vld [vmem:[%s3] sm:$0xff]
        %v322 = vld [vmem:[%s3 + $0x8] sm:$0xff]
        %v323 = vld [vmem:[%s315] sm:$0xf]
        %vm324 = vcmask 519168
        %v325 = vsel %vm324, %v323, 0.0
        %v326 = vrot.slane %v325, 4
        %v327 = vadd.f32 %v325, %v326
        %v328 = vrot.slane %v327, 2
        %v329 = vadd.f32 %v327, %v328
        %v330 = vrot.slane %v329, 1
        %v331 = vadd.f32 %v329, %v330
        %v332 = vld [vmem:[%s2] sm:$0xff]
        %v333 = vld [vmem:[%s2 + $0x8] sm:$0xff]
        %v334 = vld [vmem:[%s2 + $0x10] sm:$0xff]
        %v335 = vld [vmem:[%s2 + $0x18] sm:$0xff]
        %v336 = vld [vmem:[%s2 + $0x20] sm:$0xff]
        %v337 = vld [vmem:[%s2 + $0x28] sm:$0xff]
        %v338 = vld [vmem:[%s2 + $0x30] sm:$0xff]
        %v339 = vld [vmem:[%s2 + $0x38] sm:$0xff]
        %v340 = vld [vmem:[%s2 + $0x40] sm:$0xff]
        %v341 = vld [vmem:[%s2 + $0x48] sm:$0xff]
        %v342 = vld [vmem:[%s2 + $0x50] sm:$0xff]
        %v343 = vld [vmem:[%s2 + $0x58] sm:$0xff]
        %v344 = vld [vmem:[%s2 + $0x60] sm:$0xff]
        %v345 = vld [vmem:[%s2 + $0x68] sm:$0xff]
        %v346 = vld [vmem:[%s2 + $0x70] sm:$0xff]
        %v347 = vld [vmem:[%s2 + $0x78] sm:$0xff]
        %vm348 = vcmask 523264
        %v350 = vsel %vm348, %v331, 0
        %352 = vmatprep.subr.mxu0 %v333
        %353 = vmatpush1.msra.mxu0 %v332
        %354 = vmatprep.subr.mxu0 %v335
        %355 = vmatpush1.msra.mxu0 %v334
        %356 = vmatprep.subr.mxu0 %v337
        %357 = vmatpush1.msra.mxu0 %v336
        %358 = vmatprep.subr.mxu0 %v339
        %359 = vmatpush1.msra.mxu0 %v338
        %360 = vmatprep.subr.mxu0 %v341
        %361 = vmatpush1.msra.mxu0 %v340
        %362 = vmatprep.subr.mxu0 %v343
        %363 = vmatpush1.msra.mxu0 %v342
        %364 = vmatprep.subr.mxu0 %v345
        %365 = vmatpush1.msra.mxu0 %v344
        %366 = vmatprep.subr.mxu0 %v347
        %367 = vmatpush1.msra.mxu0 %v346
        %368 = vmatprep.subr.mxu0 0.0
        %369 = vmatpush1.msra.mxu0 0.0
        %370 = vmatprep.subr.mxu0 0.0
        %371 = vmatpush1.msra.mxu0 0.0
        %372 = vmatprep.subr.mxu0 0.0
        %373 = vmatpush1.msra.mxu0 0.0
        %374 = vmatprep.subr.mxu0 0.0
        %375 = vmatpush1.msra.mxu0 0.0
        %376 = vmatprep.subr.mxu0 0.0
        %377 = vmatpush1.msra.mxu0 0.0
        %378 = vmatprep.subr.mxu0 0.0
        %379 = vmatpush1.msra.mxu0 0.0
        %380 = vmatprep.subr.mxu0 0.0
        %381 = vmatpush1.msra.mxu0 0.0
        %382 = vmatprep.subr.mxu0 0.0
        %383 = vmatpush1.msra.mxu0 0.0
        %384 = vmatprep.subr.mxu0 0.0
        %385 = vmatpush1.msra.mxu0 0.0
        %386 = vmatprep.subr.mxu0 0.0
        %387 = vmatpush1.msra.mxu0 0.0
        %388 = vmatprep.subr.mxu0 0.0
        %389 = vmatpush1.msra.mxu0 0.0
        %390 = vmatprep.subr.mxu0 0.0
        %391 = vmatpush1.msra.mxu0 0.0
        %392 = vmatprep.subr.mxu0 0.0
        %393 = vmatpush1.msra.mxu0 0.0
        %394 = vmatprep.subr.mxu0 0.0
        %395 = vmatpush1.msra.mxu0 0.0
        %396 = vmatprep.subr.mxu0 0.0
        %397 = vmatpush1.msra.mxu0 0.0
        %398 = vmatprep.subr.mxu0 0.0
        %399 = vmatpush1.msra.mxu0 0.0
        %400 = vmatprep.subr.mxu0 0.0
        %401 = vmatpush1.msra.mxu0 0.0
        %402 = vmatprep.subr.mxu0 0.0
        %403 = vmatpush1.msra.mxu0 0.0
        %404 = vmatprep.subr.mxu0 0.0
        %405 = vmatpush1.msra.mxu0 0.0
        %406 = vmatprep.subr.mxu0 0.0
        %407 = vmatpush1.msra.mxu0 0.0
        %408 = vmatprep.subr.mxu0 0.0
        %409 = vmatpush1.msra.mxu0 0.0
        %410 = vmatprep.subr.mxu0 0.0
        %411 = vmatpush1.msra.mxu0 0.0
        %412 = vmatprep.subr.mxu0 0.0
        %413 = vmatpush1.msra.mxu0 0.0
        %414 = vmatprep.subr.mxu0 0.0
        %415 = vmatpush1.msra.mxu0 0.0
        %416 = vmatprep.mubr.f32.mxu0 0.0
        %417 = vmatmul.mubr.f32.gmra.mrb[0].mxu0 %v350
        %v418 = vpop.f32.mrb[0].mxu0
        %v419 = vadd.f32 0.0, %v418
        %v420 = vpop.f32.mrb[0].mxu0
        %v421 = vadd.f32 0.0, %v420
        %422 = vdwg.mxu0
        %v423 = vld [vmem:[%s320] sm:$0xff]
        %v425 = vcombine.high %v423, %v423
        %v429 = vrot.slane %v419, 4
        %v430 = vrot.slane %v421, 4
        %vm433 = vcmask 1043456
        %v434 = vsel %vm433, %v423, %v429
        %v435 = vsel %vm433, %v425, %v430
        %436 = vrot.lane.b32.xlu0 %v434, 17
        %v437 = vpop.permute.xlu0 %436
        %438 = vrot.lane.b32.xlu0 %v435, 17
        %v439 = vpop.permute.xlu0 %438
        %v440 = vlaneseq
        %v441 = vand.u32 %v440, 127
        %vm442 = vcmp.lt.s32.totalorder %v441, 17
        %v443 = vsel %vm442, %v437, %v439
        %v444 = vsel %vm442, %v439, %v437
        %v445 = vlaneseq
        %v446 = vshrl.u32 %v445, 7
        %v447 = vsub.s32 0, %v446
        %v448 = vrot.slane %v321, %v447
        %v449 = vlaneseq
        %v450 = vshrl.u32 %v449, 7
        %v451 = vsub.s32 0, %v450
        %v452 = vrot.slane %v322, %v451
        %v453 = vmul.f32 %v444, %v448
        %v454 = vmul.f32 %v443, %v452
        %v455 = vld [vmem:[%s4] sm:$0xff]
        %456 = vrot.lane.b32.xlu0 %v434, 16
        %v457 = vpop.permute.xlu0 %456
        %458 = vrot.lane.b32.xlu0 %v435, 16
        %v459 = vpop.permute.xlu0 %458
        %vm460 = vcmp.lt.s32.totalorder %v441, 16
        %v461 = vsel %vm460, %v457, %v459
        %v462 = vsel %vm460, %v459, %v457
        %v463 = vlaneseq
        %v464 = vshrl.u32 %v463, 7
        %v465 = vsub.s32 1, %v464
        %v466 = vrot.slane %v321, %v465
        %v467 = vlaneseq
        %v468 = vshrl.u32 %v467, 7
        %v469 = vsub.s32 1, %v468
        %v470 = vrot.slane %v322, %v469
        %v471 = vmul.f32 %v462, %v466
        %v472 = vmul.f32 %v461, %v470
        %s473 = scalar_lea.vmem %s4, 8
        %v474 = vld [vmem:[%s473] sm:$0xff]
        %vm475 = vcmask 39936
        %v477 = vsel %vm475, %v474, 0
        %vm479 = vcmask 1044480
        %v481 = vsel %vm479, %v471, 0
        %v484 = vsel %vm479, %v472, 0
        %486 = vmatprep.subr.mxu0 %v484
        %487 = vmatpush1.msra.mxu0 %v481
        %488 = vmatprep.subr.mxu0 0.0
        %489 = vmatpush1.msra.mxu0 0.0
        %490 = vmatprep.subr.mxu0 0.0
        %491 = vmatpush1.msra.mxu0 0.0
        %492 = vmatprep.subr.mxu0 0.0
        %493 = vmatpush1.msra.mxu0 0.0
        %494 = vmatprep.subr.mxu0 0.0
        %495 = vmatpush1.msra.mxu0 0.0
        %496 = vmatprep.subr.mxu0 0.0
        %497 = vmatpush1.msra.mxu0 0.0
        %498 = vmatprep.subr.mxu0 0.0
        %499 = vmatpush1.msra.mxu0 0.0
        %500 = vmatprep.subr.mxu0 0.0
        %501 = vmatpush1.msra.mxu0 0.0
        %502 = vmatprep.subr.mxu0 0.0
        %503 = vmatpush1.msra.mxu0 0.0
        %504 = vmatprep.subr.mxu0 0.0
        %505 = vmatpush1.msra.mxu0 0.0
        %506 = vmatprep.subr.mxu0 0.0
        %507 = vmatpush1.msra.mxu0 0.0
        %508 = vmatprep.subr.mxu0 0.0
        %509 = vmatpush1.msra.mxu0 0.0
        %510 = vmatprep.subr.mxu0 0.0
        %511 = vmatpush1.msra.mxu0 0.0
        %512 = vmatprep.subr.mxu0 0.0
        %513 = vmatpush1.msra.mxu0 0.0
        %514 = vmatprep.subr.mxu0 0.0
        %515 = vmatpush1.msra.mxu0 0.0
        %516 = vmatprep.subr.mxu0 0.0
        %517 = vmatpush1.msra.mxu0 0.0
        %518 = vmatprep.subr.mxu0 0.0
        %519 = vmatpush1.msra.mxu0 0.0
        %520 = vmatprep.subr.mxu0 0.0
        %521 = vmatpush1.msra.mxu0 0.0
        %522 = vmatprep.subr.mxu0 0.0
        %523 = vmatpush1.msra.mxu0 0.0
        %524 = vmatprep.subr.mxu0 0.0
        %525 = vmatpush1.msra.mxu0 0.0
        %526 = vmatprep.subr.mxu0 0.0
        %527 = vmatpush1.msra.mxu0 0.0
        %528 = vmatprep.subr.mxu0 0.0
        %529 = vmatpush1.msra.mxu0 0.0
        %530 = vmatprep.subr.mxu0 0.0
        %531 = vmatpush1.msra.mxu0 0.0
        %532 = vmatprep.subr.mxu0 0.0
        %533 = vmatpush1.msra.mxu0 0.0
        %534 = vmatprep.subr.mxu0 0.0
        %535 = vmatpush1.msra.mxu0 0.0
        %536 = vmatprep.subr.mxu0 0.0
        %537 = vmatpush1.msra.mxu0 0.0
        %538 = vmatprep.subr.mxu0 0.0
        %539 = vmatpush1.msra.mxu0 0.0
        %540 = vmatprep.subr.mxu0 0.0
        %541 = vmatpush1.msra.mxu0 0.0
        %542 = vmatprep.subr.mxu0 0.0
        %543 = vmatpush1.msra.mxu0 0.0
        %544 = vmatprep.subr.mxu0 0.0
        %545 = vmatpush1.msra.mxu0 0.0
        %546 = vmatprep.subr.mxu0 0.0
        %547 = vmatpush1.msra.mxu0 0.0
        %548 = vmatprep.subr.mxu0 0.0
        %549 = vmatpush1.msra.mxu0 0.0
        %550 = vmatprep.mubr.f32.mxu0 0.0
        %551 = vmatmul.mubr.f32.gmra.mrb[0].mxu0 %v477
        %v552 = vpop.f32.mrb[0].mxu0
        %v553 = vadd.f32 0.0, %v552
        %v554 = vpop.f32.mrb[0].mxu0
        %v555 = vadd.f32 0.0, %v554
        %556 = vdwg.mxu0
        %v558 = vsel %vm475, %v455, 0
        %v561 = vsel %vm479, %v453, 0
        %v564 = vsel %vm479, %v454, 0
        %566 = vmatprep.subr.mxu0 %v564
        %567 = vmatpush1.msra.mxu0 %v561
        %568 = vmatprep.subr.mxu0 0.0
        %569 = vmatpush1.msra.mxu0 0.0
        %570 = vmatprep.subr.mxu0 0.0
        %571 = vmatpush1.msra.mxu0 0.0
        %572 = vmatprep.subr.mxu0 0.0
        %573 = vmatpush1.msra.mxu0 0.0
        %574 = vmatprep.subr.mxu0 0.0
        %575 = vmatpush1.msra.mxu0 0.0
        %576 = vmatprep.subr.mxu0 0.0
        %577 = vmatpush1.msra.mxu0 0.0
        %578 = vmatprep.subr.mxu0 0.0
        %579 = vmatpush1.msra.mxu0 0.0
        %580 = vmatprep.subr.mxu0 0.0
        %581 = vmatpush1.msra.mxu0 0.0
        %582 = vmatprep.subr.mxu0 0.0
        %583 = vmatpush1.msra.mxu0 0.0
        %584 = vmatprep.subr.mxu0 0.0
        %585 = vmatpush1.msra.mxu0 0.0
        %586 = vmatprep.subr.mxu0 0.0
        %587 = vmatpush1.msra.mxu0 0.0
        %588 = vmatprep.subr.mxu0 0.0
        %589 = vmatpush1.msra.mxu0 0.0
        %590 = vmatprep.subr.mxu0 0.0
        %591 = vmatpush1.msra.mxu0 0.0
        %592 = vmatprep.subr.mxu0 0.0
        %593 = vmatpush1.msra.mxu0 0.0
        %594 = vmatprep.subr.mxu0 0.0
        %595 = vmatpush1.msra.mxu0 0.0
        %596 = vmatprep.subr.mxu0 0.0
        %597 = vmatpush1.msra.mxu0 0.0
        %598 = vmatprep.subr.mxu0 0.0
        %599 = vmatpush1.msra.mxu0 0.0
        %600 = vmatprep.subr.mxu0 0.0
        %601 = vmatpush1.msra.mxu0 0.0
        %602 = vmatprep.subr.mxu0 0.0
        %603 = vmatpush1.msra.mxu0 0.0
        %604 = vmatprep.subr.mxu0 0.0
        %605 = vmatpush1.msra.mxu0 0.0
        %606 = vmatprep.subr.mxu0 0.0
        %607 = vmatpush1.msra.mxu0 0.0
        %608 = vmatprep.subr.mxu0 0.0
        %609 = vmatpush1.msra.mxu0 0.0
        %610 = vmatprep.subr.mxu0 0.0
        %611 = vmatpush1.msra.mxu0 0.0
        %612 = vmatprep.subr.mxu0 0.0
        %613 = vmatpush1.msra.mxu0 0.0
        %614 = vmatprep.subr.mxu0 0.0
        %615 = vmatpush1.msra.mxu0 0.0
        %616 = vmatprep.subr.mxu0 0.0
        %617 = vmatpush1.msra.mxu0 0.0
        %618 = vmatprep.subr.mxu0 0.0
        %619 = vmatpush1.msra.mxu0 0.0
        %620 = vmatprep.subr.mxu0 0.0
        %621 = vmatpush1.msra.mxu0 0.0
        %622 = vmatprep.subr.mxu0 0.0
        %623 = vmatpush1.msra.mxu0 0.0
        %624 = vmatprep.subr.mxu0 0.0
        %625 = vmatpush1.msra.mxu0 0.0
        %626 = vmatprep.subr.mxu0 0.0
        %627 = vmatpush1.msra.mxu0 0.0
        %628 = vmatprep.subr.mxu0 0.0
        %629 = vmatpush1.msra.mxu0 0.0
        %630 = vmatprep.mubr.f32.mxu0 0.0
        %631 = vmatmul.mubr.f32.gmra.mrb[0].mxu0 %v558
        %v632 = vpop.f32.mrb[0].mxu0
        %v633 = vadd.f32 %v553, %v632
        %v634 = vpop.f32.mrb[0].mxu0
        %v635 = vadd.f32 %v555, %v634
        %636 = vdwg.mxu0
        %637 = vrot.lane.b32.xlu0 %v434, 15
        %v638 = vpop.permute.xlu0 %637
        %639 = vrot.lane.b32.xlu0 %v435, 15
        %v640 = vpop.permute.xlu0 %639
        %vm641 = vcmp.lt.s32.totalorder %v441, 15
        %v642 = vsel %vm641, %v638, %v640
        %v643 = vsel %vm641, %v640, %v638
        %v644 = vlaneseq
        %v645 = vshrl.u32 %v644, 7
        %v646 = vsub.s32 2, %v645
        %v647 = vrot.slane %v321, %v646
        %v648 = vlaneseq
        %v649 = vshrl.u32 %v648, 7
        %v650 = vsub.s32 2, %v649
        %v651 = vrot.slane %v322, %v650
        %v652 = vmul.f32 %v643, %v647
        %v653 = vmul.f32 %v642, %v651
        %s654 = scalar_lea.vmem %s4, 16
        %v655 = vld [vmem:[%s654] sm:$0xff]
        %v657 = vsel %vm475, %v655, 0
        %v660 = vsel %vm479, %v652, 0
        %v663 = vsel %vm479, %v653, 0
        %665 = vmatprep.subr.mxu0 %v663
        %666 = vmatpush1.msra.mxu0 %v660
        %667 = vmatprep.subr.mxu0 0.0
        %668 = vmatpush1.msra.mxu0 0.0
        %669 = vmatprep.subr.mxu0 0.0
        %670 = vmatpush1.msra.mxu0 0.0
        %671 = vmatprep.subr.mxu0 0.0
        %672 = vmatpush1.msra.mxu0 0.0
        %673 = vmatprep.subr.mxu0 0.0
        %674 = vmatpush1.msra.mxu0 0.0
        %675 = vmatprep.subr.mxu0 0.0
        %676 = vmatpush1.msra.mxu0 0.0
        %677 = vmatprep.subr.mxu0 0.0
        %678 = vmatpush1.msra.mxu0 0.0
        %679 = vmatprep.subr.mxu0 0.0
        %680 = vmatpush1.msra.mxu0 0.0
        %681 = vmatprep.subr.mxu0 0.0
        %682 = vmatpush1.msra.mxu0 0.0
        %683 = vmatprep.subr.mxu0 0.0
        %684 = vmatpush1.msra.mxu0 0.0
        %685 = vmatprep.subr.mxu0 0.0
        %686 = vmatpush1.msra.mxu0 0.0
        %687 = vmatprep.subr.mxu0 0.0
        %688 = vmatpush1.msra.mxu0 0.0
        %689 = vmatprep.subr.mxu0 0.0
        %690 = vmatpush1.msra.mxu0 0.0
        %691 = vmatprep.subr.mxu0 0.0
        %692 = vmatpush1.msra.mxu0 0.0
        %693 = vmatprep.subr.mxu0 0.0
        %694 = vmatpush1.msra.mxu0 0.0
        %695 = vmatprep.subr.mxu0 0.0
        %696 = vmatpush1.msra.mxu0 0.0
        %697 = vmatprep.subr.mxu0 0.0
        %698 = vmatpush1.msra.mxu0 0.0
        %699 = vmatprep.subr.mxu0 0.0
        %700 = vmatpush1.msra.mxu0 0.0
        %701 = vmatprep.subr.mxu0 0.0
        %702 = vmatpush1.msra.mxu0 0.0
        %703 = vmatprep.subr.mxu0 0.0
        %704 = vmatpush1.msra.mxu0 0.0
        %705 = vmatprep.subr.mxu0 0.0
        %706 = vmatpush1.msra.mxu0 0.0
        %707 = vmatprep.subr.mxu0 0.0
        %708 = vmatpush1.msra.mxu0 0.0
        %709 = vmatprep.subr.mxu0 0.0
        %710 = vmatpush1.msra.mxu0 0.0
        %711 = vmatprep.subr.mxu0 0.0
        %712 = vmatpush1.msra.mxu0 0.0
        %713 = vmatprep.subr.mxu0 0.0
        %714 = vmatpush1.msra.mxu0 0.0
        %715 = vmatprep.subr.mxu0 0.0
        %716 = vmatpush1.msra.mxu0 0.0
        %717 = vmatprep.subr.mxu0 0.0
        %718 = vmatpush1.msra.mxu0 0.0
        %719 = vmatprep.subr.mxu0 0.0
        %720 = vmatpush1.msra.mxu0 0.0
        %721 = vmatprep.subr.mxu0 0.0
        %722 = vmatpush1.msra.mxu0 0.0
        %723 = vmatprep.subr.mxu0 0.0
        %724 = vmatpush1.msra.mxu0 0.0
        %725 = vmatprep.subr.mxu0 0.0
        %726 = vmatpush1.msra.mxu0 0.0
        %727 = vmatprep.subr.mxu0 0.0
        %728 = vmatpush1.msra.mxu0 0.0
        %729 = vmatprep.mubr.f32.mxu0 0.0
        %730 = vmatmul.mubr.f32.gmra.mrb[0].mxu0 %v657
        %v731 = vpop.f32.mrb[0].mxu0
        %v732 = vadd.f32 0.0, %v731
        %v733 = vpop.f32.mrb[0].mxu0
        %v734 = vadd.f32 0.0, %v733
        %735 = vdwg.mxu0
        %v736 = vadd.f32 %v633, %v732
        %v737 = vadd.f32 %v635, %v734
        %738 = vrot.lane.b32.xlu0 %v434, 1
        %v739 = vpop.permute.xlu0 %738
        %740 = vrot.lane.b32.xlu0 %v435, 1
        %v741 = vpop.permute.xlu0 %740
        %vm742 = vcmp.lt.s32.totalorder %v441, 1
        %v743 = vsel %vm742, %v739, %v741
        %v744 = vsel %vm742, %v741, %v739
        %v745 = vlaneseq
        %v746 = vshrl.u32 %v745, 7
        %v747 = vsub.s32 3, %v746
        %v748 = vrot.slane %v321, %v747
        %v749 = vlaneseq
        %v750 = vshrl.u32 %v749, 7
        %v751 = vsub.s32 3, %v750
        %v752 = vrot.slane %v322, %v751
        %v753 = vmul.f32 %v744, %v748
        %v754 = vmul.f32 %v743, %v752
        %s755 = scalar_lea.vmem %s4, 24
        %v756 = vld [vmem:[%s755] sm:$0xff]
        %v758 = vsel %vm475, %v756, 0
        %v761 = vsel %vm479, %v753, 0
        %v764 = vsel %vm479, %v754, 0
        %766 = vmatprep.subr.mxu0 %v764
        %767 = vmatpush1.msra.mxu0 %v761
        %768 = vmatprep.subr.mxu0 0.0
        %769 = vmatpush1.msra.mxu0 0.0
        %770 = vmatprep.subr.mxu0 0.0
        %771 = vmatpush1.msra.mxu0 0.0
        %772 = vmatprep.subr.mxu0 0.0
        %773 = vmatpush1.msra.mxu0 0.0
        %774 = vmatprep.subr.mxu0 0.0
        %775 = vmatpush1.msra.mxu0 0.0
        %776 = vmatprep.subr.mxu0 0.0
        %777 = vmatpush1.msra.mxu0 0.0
        %778 = vmatprep.subr.mxu0 0.0
        %779 = vmatpush1.msra.mxu0 0.0
        %780 = vmatprep.subr.mxu0 0.0
        %781 = vmatpush1.msra.mxu0 0.0
        %782 = vmatprep.subr.mxu0 0.0
        %783 = vmatpush1.msra.mxu0 0.0
        %784 = vmatprep.subr.mxu0 0.0
        %785 = vmatpush1.msra.mxu0 0.0
        %786 = vmatprep.subr.mxu0 0.0
        %787 = vmatpush1.msra.mxu0 0.0
        %788 = vmatprep.subr.mxu0 0.0
        %789 = vmatpush1.msra.mxu0 0.0
        %790 = vmatprep.subr.mxu0 0.0
        %791 = vmatpush1.msra.mxu0 0.0
        %792 = vmatprep.subr.mxu0 0.0
        %793 = vmatpush1.msra.mxu0 0.0
        %794 = vmatprep.subr.mxu0 0.0
        %795 = vmatpush1.msra.mxu0 0.0
        %796 = vmatprep.subr.mxu0 0.0
        %797 = vmatpush1.msra.mxu0 0.0
        %798 = vmatprep.subr.mxu0 0.0
        %799 = vmatpush1.msra.mxu0 0.0
        %800 = vmatprep.subr.mxu0 0.0
        %801 = vmatpush1.msra.mxu0 0.0
        %802 = vmatprep.subr.mxu0 0.0
        %803 = vmatpush1.msra.mxu0 0.0
        %804 = vmatprep.subr.mxu0 0.0
        %805 = vmatpush1.msra.mxu0 0.0
        %806 = vmatprep.subr.mxu0 0.0
        %807 = vmatpush1.msra.mxu0 0.0
        %808 = vmatprep.subr.mxu0 0.0
        %809 = vmatpush1.msra.mxu0 0.0
        %810 = vmatprep.subr.mxu0 0.0
        %811 = vmatpush1.msra.mxu0 0.0
        %812 = vmatprep.subr.mxu0 0.0
        %813 = vmatpush1.msra.mxu0 0.0
        %814 = vmatprep.subr.mxu0 0.0
        %815 = vmatpush1.msra.mxu0 0.0
        %816 = vmatprep.subr.mxu0 0.0
        %817 = vmatpush1.msra.mxu0 0.0
        %818 = vmatprep.subr.mxu0 0.0
        %819 = vmatpush1.msra.mxu0 0.0
        %820 = vmatprep.subr.mxu0 0.0
        %821 = vmatpush1.msra.mxu0 0.0
        %822 = vmatprep.subr.mxu0 0.0
        %823 = vmatpush1.msra.mxu0 0.0
        %824 = vmatprep.subr.mxu0 0.0
        %825 = vmatpush1.msra.mxu0 0.0
        %826 = vmatprep.subr.mxu0 0.0
        %827 = vmatpush1.msra.mxu0 0.0
        %828 = vmatprep.subr.mxu0 0.0
        %829 = vmatpush1.msra.mxu0 0.0
        %830 = vmatprep.mubr.f32.mxu0 0.0
        %831 = vmatmul.mubr.f32.gmra.mrb[0].mxu0 %v758
        %v832 = vpop.f32.mrb[0].mxu0
        %v833 = vadd.f32 0.0, %v832
        %v834 = vpop.f32.mrb[0].mxu0
        %v835 = vadd.f32 0.0, %v834
        %836 = vdwg.mxu0
        %v837 = vadd.f32 %v736, %v833
        %v838 = vadd.f32 %v737, %v835
        %s839 = scalar_lea.vmem %s4, 32
        %v840 = vld [vmem:[%s839] sm:$0xff]
        %v842 = vsel %vm475, %v840, 0
        %v845 = vsel %vm479, %v434, 0
        %v848 = vsel %vm479, %v435, 0
        %850 = vmatprep.subr.mxu0 %v848
        %851 = vmatpush1.msra.mxu0 %v845
        %852 = vmatprep.subr.mxu0 0.0
        %853 = vmatpush1.msra.mxu0 0.0
        %854 = vmatprep.subr.mxu0 0.0
        %855 = vmatpush1.msra.mxu0 0.0
        %856 = vmatprep.subr.mxu0 0.0
        %857 = vmatpush1.msra.mxu0 0.0
        %858 = vmatprep.subr.mxu0 0.0
        %859 = vmatpush1.msra.mxu0 0.0
        %860 = vmatprep.subr.mxu0 0.0
        %861 = vmatpush1.msra.mxu0 0.0
        %862 = vmatprep.subr.mxu0 0.0
        %863 = vmatpush1.msra.mxu0 0.0
        %864 = vmatprep.subr.mxu0 0.0
        %865 = vmatpush1.msra.mxu0 0.0
        %866 = vmatprep.subr.mxu0 0.0
        %867 = vmatpush1.msra.mxu0 0.0
        %868 = vmatprep.subr.mxu0 0.0
        %869 = vmatpush1.msra.mxu0 0.0
        %870 = vmatprep.subr.mxu0 0.0
        %871 = vmatpush1.msra.mxu0 0.0
        %872 = vmatprep.subr.mxu0 0.0
        %873 = vmatpush1.msra.mxu0 0.0
        %874 = vmatprep.subr.mxu0 0.0
        %875 = vmatpush1.msra.mxu0 0.0
        %876 = vmatprep.subr.mxu0 0.0
        %877 = vmatpush1.msra.mxu0 0.0
        %878 = vmatprep.subr.mxu0 0.0
        %879 = vmatpush1.msra.mxu0 0.0
        %880 = vmatprep.subr.mxu0 0.0
        %881 = vmatpush1.msra.mxu0 0.0
        %882 = vmatprep.subr.mxu0 0.0
        %883 = vmatpush1.msra.mxu0 0.0
        %884 = vmatprep.subr.mxu0 0.0
        %885 = vmatpush1.msra.mxu0 0.0
        %886 = vmatprep.subr.mxu0 0.0
        %887 = vmatpush1.msra.mxu0 0.0
        %888 = vmatprep.subr.mxu0 0.0
        %889 = vmatpush1.msra.mxu0 0.0
        %890 = vmatprep.subr.mxu0 0.0
        %891 = vmatpush1.msra.mxu0 0.0
        %892 = vmatprep.subr.mxu0 0.0
        %893 = vmatpush1.msra.mxu0 0.0
        %894 = vmatprep.subr.mxu0 0.0
        %895 = vmatpush1.msra.mxu0 0.0
        %896 = vmatprep.subr.mxu0 0.0
        %897 = vmatpush1.msra.mxu0 0.0
        %898 = vmatprep.subr.mxu0 0.0
        %899 = vmatpush1.msra.mxu0 0.0
        %900 = vmatprep.subr.mxu0 0.0
        %901 = vmatpush1.msra.mxu0 0.0
        %902 = vmatprep.subr.mxu0 0.0
        %903 = vmatpush1.msra.mxu0 0.0
        %904 = vmatprep.subr.mxu0 0.0
        %905 = vmatpush1.msra.mxu0 0.0
        %906 = vmatprep.subr.mxu0 0.0
        %907 = vmatpush1.msra.mxu0 0.0
        %908 = vmatprep.subr.mxu0 0.0
        %909 = vmatpush1.msra.mxu0 0.0
        %910 = vmatprep.subr.mxu0 0.0
        %911 = vmatpush1.msra.mxu0 0.0
        %912 = vmatprep.subr.mxu0 0.0
        %913 = vmatpush1.msra.mxu0 0.0
        %914 = vmatprep.mubr.f32.mxu0 0.0
        %915 = vmatmul.mubr.f32.gmra.mrb[0].mxu0 %v842
        %v916 = vpop.f32.mrb[0].mxu0
        %v917 = vadd.f32 0.0, %v916
        %v918 = vpop.f32.mrb[0].mxu0
        %v919 = vadd.f32 0.0, %v918
        %920 = vdwg.mxu0
        %v921 = vadd.f32 %v837, %v917
        %v922 = vadd.f32 %v838, %v919
        %923 = vrot.lane.b32.xlu0 %v434, 127
        %v924 = vpop.permute.xlu0 %923
        %925 = vrot.lane.b32.xlu0 %v435, 127
        %v926 = vpop.permute.xlu0 %925
        %vm927 = vcmp.lt.s32.totalorder %v441, 127
        %v928 = vsel %vm927, %v924, %v926
        %v929 = vsel %vm927, %v926, %v924
        %v930 = vlaneseq
        %v931 = vshrl.u32 %v930, 7
        %v932 = vsub.s32 4, %v931
        %v933 = vrot.slane %v321, %v932
        %v934 = vlaneseq
        %v935 = vshrl.u32 %v934, 7
        %v936 = vsub.s32 4, %v935
        %v937 = vrot.slane %v322, %v936
        %v938 = vmul.f32 %v928, %v933
        %v939 = vmul.f32 %v929, %v937
        %s940 = scalar_lea.vmem %s4, 40
        %v941 = vld [vmem:[%s940] sm:$0xff]
        %v943 = vsel %vm475, %v941, 0
        %v946 = vsel %vm479, %v938, 0
        %v949 = vsel %vm479, %v939, 0
        %951 = vmatprep.subr.mxu0 %v949
        %952 = vmatpush1.msra.mxu0 %v946
        %953 = vmatprep.subr.mxu0 0.0
        %954 = vmatpush1.msra.mxu0 0.0
        %955 = vmatprep.subr.mxu0 0.0
        %956 = vmatpush1.msra.mxu0 0.0
        %957 = vmatprep.subr.mxu0 0.0
        %958 = vmatpush1.msra.mxu0 0.0
        %959 = vmatprep.subr.mxu0 0.0
        %960 = vmatpush1.msra.mxu0 0.0
        %961 = vmatprep.subr.mxu0 0.0
        %962 = vmatpush1.msra.mxu0 0.0
        %963 = vmatprep.subr.mxu0 0.0
        %964 = vmatpush1.msra.mxu0 0.0
        %965 = vmatprep.subr.mxu0 0.0
        %966 = vmatpush1.msra.mxu0 0.0
        %967 = vmatprep.subr.mxu0 0.0
        %968 = vmatpush1.msra.mxu0 0.0
        %969 = vmatprep.subr.mxu0 0.0
        %970 = vmatpush1.msra.mxu0 0.0
        %971 = vmatprep.subr.mxu0 0.0
        %972 = vmatpush1.msra.mxu0 0.0
        %973 = vmatprep.subr.mxu0 0.0
        %974 = vmatpush1.msra.mxu0 0.0
        %975 = vmatprep.subr.mxu0 0.0
        %976 = vmatpush1.msra.mxu0 0.0
        %977 = vmatprep.subr.mxu0 0.0
        %978 = vmatpush1.msra.mxu0 0.0
        %979 = vmatprep.subr.mxu0 0.0
        %980 = vmatpush1.msra.mxu0 0.0
        %981 = vmatprep.subr.mxu0 0.0
        %982 = vmatpush1.msra.mxu0 0.0
        %983 = vmatprep.subr.mxu0 0.0
        %984 = vmatpush1.msra.mxu0 0.0
        %985 = vmatprep.subr.mxu0 0.0
        %986 = vmatpush1.msra.mxu0 0.0
        %987 = vmatprep.subr.mxu0 0.0
        %988 = vmatpush1.msra.mxu0 0.0
        %989 = vmatprep.subr.mxu0 0.0
        %990 = vmatpush1.msra.mxu0 0.0
        %991 = vmatprep.subr.mxu0 0.0
        %992 = vmatpush1.msra.mxu0 0.0
        %993 = vmatprep.subr.mxu0 0.0
        %994 = vmatpush1.msra.mxu0 0.0
        %995 = vmatprep.subr.mxu0 0.0
        %996 = vmatpush1.msra.mxu0 0.0
        %997 = vmatprep.subr.mxu0 0.0
        %998 = vmatpush1.msra.mxu0 0.0
        %999 = vmatprep.subr.mxu0 0.0
        %1000 = vmatpush1.msra.mxu0 0.0
        %1001 = vmatprep.subr.mxu0 0.0
        %1002 = vmatpush1.msra.mxu0 0.0
        %1003 = vmatprep.subr.mxu0 0.0
        %1004 = vmatpush1.msra.mxu0 0.0
        %1005 = vmatprep.subr.mxu0 0.0
        %1006 = vmatpush1.msra.mxu0 0.0
        %1007 = vmatprep.subr.mxu0 0.0
        %1008 = vmatpush1.msra.mxu0 0.0
        %1009 = vmatprep.subr.mxu0 0.0
        %1010 = vmatpush1.msra.mxu0 0.0
        %1011 = vmatprep.subr.mxu0 0.0
        %1012 = vmatpush1.msra.mxu0 0.0
        %1013 = vmatprep.subr.mxu0 0.0
        %1014 = vmatpush1.msra.mxu0 0.0
        %1015 = vmatprep.mubr.f32.mxu0 0.0
        %1016 = vmatmul.mubr.f32.gmra.mrb[0].mxu0 %v943
        %v1017 = vpop.f32.mrb[0].mxu0
        %v1018 = vadd.f32 0.0, %v1017
        %v1019 = vpop.f32.mrb[0].mxu0
        %v1020 = vadd.f32 0.0, %v1019
        %1021 = vdwg.mxu0
        %v1022 = vadd.f32 %v921, %v1018
        %v1023 = vadd.f32 %v922, %v1020
        %1024 = vrot.lane.b32.xlu0 %v434, 113
        %v1025 = vpop.permute.xlu0 %1024
        %1026 = vrot.lane.b32.xlu0 %v435, 113
        %v1027 = vpop.permute.xlu0 %1026
        %vm1028 = vcmp.lt.s32.totalorder %v441, 113
        %v1029 = vsel %vm1028, %v1025, %v1027
        %v1030 = vsel %vm1028, %v1027, %v1025
        %v1031 = vlaneseq
        %v1032 = vshrl.u32 %v1031, 7
        %v1033 = vsub.s32 5, %v1032
        %v1034 = vrot.slane %v321, %v1033
        %v1035 = vlaneseq
        %v1036 = vshrl.u32 %v1035, 7
        %v1037 = vsub.s32 5, %v1036
        %v1038 = vrot.slane %v322, %v1037
        %v1039 = vmul.f32 %v1029, %v1034
        %v1040 = vmul.f32 %v1030, %v1038
        %s1041 = scalar_lea.vmem %s4, 48
        %v1042 = vld [vmem:[%s1041] sm:$0xff]
        %v1044 = vsel %vm475, %v1042, 0
        %v1047 = vsel %vm479, %v1039, 0
        %v1050 = vsel %vm479, %v1040, 0
        %1052 = vmatprep.subr.mxu0 %v1050
        %1053 = vmatpush1.msra.mxu0 %v1047
        %1054 = vmatprep.subr.mxu0 0.0
        %1055 = vmatpush1.msra.mxu0 0.0
        %1056 = vmatprep.subr.mxu0 0.0
        %1057 = vmatpush1.msra.mxu0 0.0
        %1058 = vmatprep.subr.mxu0 0.0
        %1059 = vmatpush1.msra.mxu0 0.0
        %1060 = vmatprep.subr.mxu0 0.0
        %1061 = vmatpush1.msra.mxu0 0.0
        %1062 = vmatprep.subr.mxu0 0.0
        %1063 = vmatpush1.msra.mxu0 0.0
        %1064 = vmatprep.subr.mxu0 0.0
        %1065 = vmatpush1.msra.mxu0 0.0
        %1066 = vmatprep.subr.mxu0 0.0
        %1067 = vmatpush1.msra.mxu0 0.0
        %1068 = vmatprep.subr.mxu0 0.0
        %1069 = vmatpush1.msra.mxu0 0.0
        %1070 = vmatprep.subr.mxu0 0.0
        %1071 = vmatpush1.msra.mxu0 0.0
        %1072 = vmatprep.subr.mxu0 0.0
        %1073 = vmatpush1.msra.mxu0 0.0
        %1074 = vmatprep.subr.mxu0 0.0
        %1075 = vmatpush1.msra.mxu0 0.0
        %1076 = vmatprep.subr.mxu0 0.0
        %1077 = vmatpush1.msra.mxu0 0.0
        %1078 = vmatprep.subr.mxu0 0.0
        %1079 = vmatpush1.msra.mxu0 0.0
        %1080 = vmatprep.subr.mxu0 0.0
        %1081 = vmatpush1.msra.mxu0 0.0
        %1082 = vmatprep.subr.mxu0 0.0
        %1083 = vmatpush1.msra.mxu0 0.0
        %1084 = vmatprep.subr.mxu0 0.0
        %1085 = vmatpush1.msra.mxu0 0.0
        %1086 = vmatprep.subr.mxu0 0.0
        %1087 = vmatpush1.msra.mxu0 0.0
        %1088 = vmatprep.subr.mxu0 0.0
        %1089 = vmatpush1.msra.mxu0 0.0
        %1090 = vmatprep.subr.mxu0 0.0
        %1091 = vmatpush1.msra.mxu0 0.0
        %1092 = vmatprep.subr.mxu0 0.0
        %1093 = vmatpush1.msra.mxu0 0.0
        %1094 = vmatprep.subr.mxu0 0.0
        %1095 = vmatpush1.msra.mxu0 0.0
        %1096 = vmatprep.subr.mxu0 0.0
        %1097 = vmatpush1.msra.mxu0 0.0
        %1098 = vmatprep.subr.mxu0 0.0
        %1099 = vmatpush1.msra.mxu0 0.0
        %1100 = vmatprep.subr.mxu0 0.0
        %1101 = vmatpush1.msra.mxu0 0.0
        %1102 = vmatprep.subr.mxu0 0.0
        %1103 = vmatpush1.msra.mxu0 0.0
        %1104 = vmatprep.subr.mxu0 0.0
        %1105 = vmatpush1.msra.mxu0 0.0
        %1106 = vmatprep.subr.mxu0 0.0
        %1107 = vmatpush1.msra.mxu0 0.0
        %1108 = vmatprep.subr.mxu0 0.0
        %1109 = vmatpush1.msra.mxu0 0.0
        %1110 = vmatprep.subr.mxu0 0.0
        %1111 = vmatpush1.msra.mxu0 0.0
        %1112 = vmatprep.subr.mxu0 0.0
        %1113 = vmatpush1.msra.mxu0 0.0
        %1114 = vmatprep.subr.mxu0 0.0
        %1115 = vmatpush1.msra.mxu0 0.0
        %1116 = vmatprep.mubr.f32.mxu0 0.0
        %1117 = vmatmul.mubr.f32.gmra.mrb[0].mxu0 %v1044
        %v1118 = vpop.f32.mrb[0].mxu0
        %v1119 = vadd.f32 0.0, %v1118
        %v1120 = vpop.f32.mrb[0].mxu0
        %v1121 = vadd.f32 0.0, %v1120
        %1122 = vdwg.mxu0
        %v1123 = vadd.f32 %v1022, %v1119
        %v1124 = vadd.f32 %v1023, %v1121
        %1125 = vrot.lane.b32.xlu0 %v434, 112
        %v1126 = vpop.permute.xlu0 %1125
        %1127 = vrot.lane.b32.xlu0 %v435, 112
        %v1128 = vpop.permute.xlu0 %1127
        %vm1129 = vcmp.lt.s32.totalorder %v441, 112
        %v1130 = vsel %vm1129, %v1126, %v1128
        %v1131 = vsel %vm1129, %v1128, %v1126
        %v1132 = vlaneseq
        %v1133 = vshrl.u32 %v1132, 7
        %v1134 = vsub.s32 6, %v1133
        %v1135 = vrot.slane %v321, %v1134
        %v1136 = vlaneseq
        %v1137 = vshrl.u32 %v1136, 7
        %v1138 = vsub.s32 6, %v1137
        %v1139 = vrot.slane %v322, %v1138
        %v1140 = vmul.f32 %v1130, %v1135
        %v1141 = vmul.f32 %v1131, %v1139
        %s1142 = scalar_lea.vmem %s4, 56
        %v1143 = vld [vmem:[%s1142] sm:$0xff]
        %v1145 = vsel %vm475, %v1143, 0
        %v1148 = vsel %vm479, %v1140, 0
        %v1151 = vsel %vm479, %v1141, 0
        %1153 = vmatprep.subr.mxu0 %v1151
        %1154 = vmatpush1.msra.mxu0 %v1148
        %1155 = vmatprep.subr.mxu0 0.0
        %1156 = vmatpush1.msra.mxu0 0.0
        %1157 = vmatprep.subr.mxu0 0.0
        %1158 = vmatpush1.msra.mxu0 0.0
        %1159 = vmatprep.subr.mxu0 0.0
        %1160 = vmatpush1.msra.mxu0 0.0
        %1161 = vmatprep.subr.mxu0 0.0
        %1162 = vmatpush1.msra.mxu0 0.0
        %1163 = vmatprep.subr.mxu0 0.0
        %1164 = vmatpush1.msra.mxu0 0.0
        %1165 = vmatprep.subr.mxu0 0.0
        %1166 = vmatpush1.msra.mxu0 0.0
        %1167 = vmatprep.subr.mxu0 0.0
        %1168 = vmatpush1.msra.mxu0 0.0
        %1169 = vmatprep.subr.mxu0 0.0
        %1170 = vmatpush1.msra.mxu0 0.0
        %1171 = vmatprep.subr.mxu0 0.0
        %1172 = vmatpush1.msra.mxu0 0.0
        %1173 = vmatprep.subr.mxu0 0.0
        %1174 = vmatpush1.msra.mxu0 0.0
        %1175 = vmatprep.subr.mxu0 0.0
        %1176 = vmatpush1.msra.mxu0 0.0
        %1177 = vmatprep.subr.mxu0 0.0
        %1178 = vmatpush1.msra.mxu0 0.0
        %1179 = vmatprep.subr.mxu0 0.0
        %1180 = vmatpush1.msra.mxu0 0.0
        %1181 = vmatprep.subr.mxu0 0.0
        %1182 = vmatpush1.msra.mxu0 0.0
        %1183 = vmatprep.subr.mxu0 0.0
        %1184 = vmatpush1.msra.mxu0 0.0
        %1185 = vmatprep.subr.mxu0 0.0
        %1186 = vmatpush1.msra.mxu0 0.0
        %1187 = vmatprep.subr.mxu0 0.0
        %1188 = vmatpush1.msra.mxu0 0.0
        %1189 = vmatprep.subr.mxu0 0.0
        %1190 = vmatpush1.msra.mxu0 0.0
        %1191 = vmatprep.subr.mxu0 0.0
        %1192 = vmatpush1.msra.mxu0 0.0
        %1193 = vmatprep.subr.mxu0 0.0
        %1194 = vmatpush1.msra.mxu0 0.0
        %1195 = vmatprep.subr.mxu0 0.0
        %1196 = vmatpush1.msra.mxu0 0.0
        %1197 = vmatprep.subr.mxu0 0.0
        %1198 = vmatpush1.msra.mxu0 0.0
        %1199 = vmatprep.subr.mxu0 0.0
        %1200 = vmatpush1.msra.mxu0 0.0
        %1201 = vmatprep.subr.mxu0 0.0
        %1202 = vmatpush1.msra.mxu0 0.0
        %1203 = vmatprep.subr.mxu0 0.0
        %1204 = vmatpush1.msra.mxu0 0.0
        %1205 = vmatprep.subr.mxu0 0.0
        %1206 = vmatpush1.msra.mxu0 0.0
        %1207 = vmatprep.subr.mxu0 0.0
        %1208 = vmatpush1.msra.mxu0 0.0
        %1209 = vmatprep.subr.mxu0 0.0
        %1210 = vmatpush1.msra.mxu0 0.0
        %1211 = vmatprep.subr.mxu0 0.0
        %1212 = vmatpush1.msra.mxu0 0.0
        %1213 = vmatprep.subr.mxu0 0.0
        %1214 = vmatpush1.msra.mxu0 0.0
        %1215 = vmatprep.subr.mxu0 0.0
        %1216 = vmatpush1.msra.mxu0 0.0
        %1217 = vmatprep.mubr.f32.mxu0 0.0
        %1218 = vmatmul.mubr.f32.gmra.mrb[0].mxu0 %v1145
        %v1219 = vpop.f32.mrb[0].mxu0
        %v1220 = vadd.f32 0.0, %v1219
        %v1221 = vpop.f32.mrb[0].mxu0
        %v1222 = vadd.f32 0.0, %v1221
        %1223 = vdwg.mxu0
        %v1224 = vadd.f32 %v1123, %v1220
        %v1225 = vadd.f32 %v1124, %v1222
        %1226 = vrot.lane.b32.xlu0 %v434, 111
        %v1227 = vpop.permute.xlu0 %1226
        %1228 = vrot.lane.b32.xlu0 %v435, 111
        %v1229 = vpop.permute.xlu0 %1228
        %vm1230 = vcmp.lt.s32.totalorder %v441, 111
        %v1231 = vsel %vm1230, %v1227, %v1229
        %v1232 = vsel %vm1230, %v1229, %v1227
        %v1233 = vlaneseq
        %v1234 = vshrl.u32 %v1233, 7
        %v1235 = vsub.s32 7, %v1234
        %v1236 = vrot.slane %v321, %v1235
        %v1237 = vlaneseq
        %v1238 = vshrl.u32 %v1237, 7
        %v1239 = vsub.s32 7, %v1238
        %v1240 = vrot.slane %v322, %v1239
        %v1241 = vmul.f32 %v1231, %v1236
        %v1242 = vmul.f32 %v1232, %v1240
        %s1243 = scalar_lea.vmem %s4, 64
        %v1244 = vld [vmem:[%s1243] sm:$0xff]
        %v1246 = vsel %vm475, %v1244, 0
        %v1249 = vsel %vm479, %v1241, 0
        %v1252 = vsel %vm479, %v1242, 0
        %1254 = vmatprep.subr.mxu0 %v1252
        %1255 = vmatpush1.msra.mxu0 %v1249
        %1256 = vmatprep.subr.mxu0 0.0
        %1257 = vmatpush1.msra.mxu0 0.0
        %1258 = vmatprep.subr.mxu0 0.0
        %1259 = vmatpush1.msra.mxu0 0.0
        %1260 = vmatprep.subr.mxu0 0.0
        %1261 = vmatpush1.msra.mxu0 0.0
        %1262 = vmatprep.subr.mxu0 0.0
        %1263 = vmatpush1.msra.mxu0 0.0
        %1264 = vmatprep.subr.mxu0 0.0
        %1265 = vmatpush1.msra.mxu0 0.0
        %1266 = vmatprep.subr.mxu0 0.0
        %1267 = vmatpush1.msra.mxu0 0.0
        %1268 = vmatprep.subr.mxu0 0.0
        %1269 = vmatpush1.msra.mxu0 0.0
        %1270 = vmatprep.subr.mxu0 0.0
        %1271 = vmatpush1.msra.mxu0 0.0
        %1272 = vmatprep.subr.mxu0 0.0
        %1273 = vmatpush1.msra.mxu0 0.0
        %1274 = vmatprep.subr.mxu0 0.0
        %1275 = vmatpush1.msra.mxu0 0.0
        %1276 = vmatprep.subr.mxu0 0.0
        %1277 = vmatpush1.msra.mxu0 0.0
        %1278 = vmatprep.subr.mxu0 0.0
        %1279 = vmatpush1.msra.mxu0 0.0
        %1280 = vmatprep.subr.mxu0 0.0
        %1281 = vmatpush1.msra.mxu0 0.0
        %1282 = vmatprep.subr.mxu0 0.0
        %1283 = vmatpush1.msra.mxu0 0.0
        %1284 = vmatprep.subr.mxu0 0.0
        %1285 = vmatpush1.msra.mxu0 0.0
        %1286 = vmatprep.subr.mxu0 0.0
        %1287 = vmatpush1.msra.mxu0 0.0
        %1288 = vmatprep.subr.mxu0 0.0
        %1289 = vmatpush1.msra.mxu0 0.0
        %1290 = vmatprep.subr.mxu0 0.0
        %1291 = vmatpush1.msra.mxu0 0.0
        %1292 = vmatprep.subr.mxu0 0.0
        %1293 = vmatpush1.msra.mxu0 0.0
        %1294 = vmatprep.subr.mxu0 0.0
        %1295 = vmatpush1.msra.mxu0 0.0
        %1296 = vmatprep.subr.mxu0 0.0
        %1297 = vmatpush1.msra.mxu0 0.0
        %1298 = vmatprep.subr.mxu0 0.0
        %1299 = vmatpush1.msra.mxu0 0.0
        %1300 = vmatprep.subr.mxu0 0.0
        %1301 = vmatpush1.msra.mxu0 0.0
        %1302 = vmatprep.subr.mxu0 0.0
        %1303 = vmatpush1.msra.mxu0 0.0
        %1304 = vmatprep.subr.mxu0 0.0
        %1305 = vmatpush1.msra.mxu0 0.0
        %1306 = vmatprep.subr.mxu0 0.0
        %1307 = vmatpush1.msra.mxu0 0.0
        %1308 = vmatprep.subr.mxu0 0.0
        %1309 = vmatpush1.msra.mxu0 0.0
        %1310 = vmatprep.subr.mxu0 0.0
        %1311 = vmatpush1.msra.mxu0 0.0
        %1312 = vmatprep.subr.mxu0 0.0
        %1313 = vmatpush1.msra.mxu0 0.0
        %1314 = vmatprep.subr.mxu0 0.0
        %1315 = vmatpush1.msra.mxu0 0.0
        %1316 = vmatprep.subr.mxu0 0.0
        %1317 = vmatpush1.msra.mxu0 0.0
        %1318 = vmatprep.mubr.f32.mxu0 0.0
        %1319 = vmatmul.mubr.f32.gmra.mrb[0].mxu0 %v1246
        %v1320 = vpop.f32.mrb[0].mxu0
        %v1321 = vadd.f32 0.0, %v1320
        %v1322 = vpop.f32.mrb[0].mxu0
        %v1323 = vadd.f32 0.0, %v1322
        %1324 = vdwg.mxu0
        %v1325 = vadd.f32 %v1224, %v1321
        %v1326 = vadd.f32 %v1225, %v1323
        %v1327 = vld [vmem:[%s5] sm:$0xff]
        %1329 = vset.pattern.permute.xlu0 0
        %1330 = vperm.xlu0 %1329, %v1327
        %v1331 = vpop.permute.xlu0 %1330
        %v1333 = vadd.f32 %v1325, %v1331
        %v1334 = vadd.f32 %v1326, %v1331
        %v1335 = vmax.f32 %v1333, 0.0
        %v1336 = vmax.f32 %v1334, 0.0
        %1337 = vrot.lane.b32.xlu0 %v1335, 17
        %v1338 = vpop.permute.xlu0 %1337
        %1339 = vrot.lane.b32.xlu0 %v1336, 17
        %v1340 = vpop.permute.xlu0 %1339
        %v1341 = vsel %vm442, %v1338, %v1340
        %v1342 = vsel %vm442, %v1340, %v1338
        %v1343 = vmul.f32 %v1342, %v448
        %v1344 = vmul.f32 %v1341, %v452
        %v1345 = vld [vmem:[%s6] sm:$0xff]
        %1346 = vrot.lane.b32.xlu0 %v1335, 16
        %v1347 = vpop.permute.xlu0 %1346
        %1348 = vrot.lane.b32.xlu0 %v1336, 16
        %v1349 = vpop.permute.xlu0 %1348
        %v1350 = vsel %vm460, %v1347, %v1349
        %v1351 = vsel %vm460, %v1349, %v1347
        %v1352 = vmul.f32 %v1351, %v466
        %v1353 = vmul.f32 %v1350, %v470
        %s1354 = scalar_lea.vmem %s6, 8
        %v1355 = vld [vmem:[%s1354] sm:$0xff]
        %vm1356 = vcmask 64512
        %v1358 = vsel %vm1356, %v1355, 0
        %1360 = vmatprep.subr.mxu0 %v1353
        %1361 = vmatpush1.msra.mxu0 %v1352
        %1362 = vmatprep.subr.mxu0 0.0
        %1363 = vmatpush1.msra.mxu0 0.0
        %1364 = vmatprep.subr.mxu0 0.0
        %1365 = vmatpush1.msra.mxu0 0.0
        %1366 = vmatprep.subr.mxu0 0.0
        %1367 = vmatpush1.msra.mxu0 0.0
        %1368 = vmatprep.subr.mxu0 0.0
        %1369 = vmatpush1.msra.mxu0 0.0
        %1370 = vmatprep.subr.mxu0 0.0
        %1371 = vmatpush1.msra.mxu0 0.0
        %1372 = vmatprep.subr.mxu0 0.0
        %1373 = vmatpush1.msra.mxu0 0.0
        %1374 = vmatprep.subr.mxu0 0.0
        %1375 = vmatpush1.msra.mxu0 0.0
        %1376 = vmatprep.subr.mxu0 0.0
        %1377 = vmatpush1.msra.mxu0 0.0
        %1378 = vmatprep.subr.mxu0 0.0
        %1379 = vmatpush1.msra.mxu0 0.0
        %1380 = vmatprep.subr.mxu0 0.0
        %1381 = vmatpush1.msra.mxu0 0.0
        %1382 = vmatprep.subr.mxu0 0.0
        %1383 = vmatpush1.msra.mxu0 0.0
        %1384 = vmatprep.subr.mxu0 0.0
        %1385 = vmatpush1.msra.mxu0 0.0
        %1386 = vmatprep.subr.mxu0 0.0
        %1387 = vmatpush1.msra.mxu0 0.0
        %1388 = vmatprep.subr.mxu0 0.0
        %1389 = vmatpush1.msra.mxu0 0.0
        %1390 = vmatprep.subr.mxu0 0.0
        %1391 = vmatpush1.msra.mxu0 0.0
        %1392 = vmatprep.subr.mxu0 0.0
        %1393 = vmatpush1.msra.mxu0 0.0
        %1394 = vmatprep.subr.mxu0 0.0
        %1395 = vmatpush1.msra.mxu0 0.0
        %1396 = vmatprep.subr.mxu0 0.0
        %1397 = vmatpush1.msra.mxu0 0.0
        %1398 = vmatprep.subr.mxu0 0.0
        %1399 = vmatpush1.msra.mxu0 0.0
        %1400 = vmatprep.subr.mxu0 0.0
        %1401 = vmatpush1.msra.mxu0 0.0
        %1402 = vmatprep.subr.mxu0 0.0
        %1403 = vmatpush1.msra.mxu0 0.0
        %1404 = vmatprep.subr.mxu0 0.0
        %1405 = vmatpush1.msra.mxu0 0.0
        %1406 = vmatprep.subr.mxu0 0.0
        %1407 = vmatpush1.msra.mxu0 0.0
        %1408 = vmatprep.subr.mxu0 0.0
        %1409 = vmatpush1.msra.mxu0 0.0
        %1410 = vmatprep.subr.mxu0 0.0
        %1411 = vmatpush1.msra.mxu0 0.0
        %1412 = vmatprep.subr.mxu0 0.0
        %1413 = vmatpush1.msra.mxu0 0.0
        %1414 = vmatprep.subr.mxu0 0.0
        %1415 = vmatpush1.msra.mxu0 0.0
        %1416 = vmatprep.subr.mxu0 0.0
        %1417 = vmatpush1.msra.mxu0 0.0
        %1418 = vmatprep.subr.mxu0 0.0
        %1419 = vmatpush1.msra.mxu0 0.0
        %1420 = vmatprep.subr.mxu0 0.0
        %1421 = vmatpush1.msra.mxu0 0.0
        %1422 = vmatprep.subr.mxu0 0.0
        %1423 = vmatpush1.msra.mxu0 0.0
        %1424 = vmatprep.mubr.f32.mxu0 0.0
        %1425 = vmatmul.mubr.f32.gmra.mrb[0].mxu0 %v1358
        %v1426 = vpop.f32.mrb[0].mxu0
        %v1427 = vadd.f32 0.0, %v1426
        %v1428 = vpop.f32.mrb[0].mxu0
        %v1429 = vadd.f32 0.0, %v1428
        %1430 = vdwg.mxu0
        %v1432 = vsel %vm1356, %v1345, 0
        %1434 = vmatprep.subr.mxu0 %v1344
        %1435 = vmatpush1.msra.mxu0 %v1343
        %1436 = vmatprep.subr.mxu0 0.0
        %1437 = vmatpush1.msra.mxu0 0.0
        %1438 = vmatprep.subr.mxu0 0.0
        %1439 = vmatpush1.msra.mxu0 0.0
        %1440 = vmatprep.subr.mxu0 0.0
        %1441 = vmatpush1.msra.mxu0 0.0
        %1442 = vmatprep.subr.mxu0 0.0
        %1443 = vmatpush1.msra.mxu0 0.0
        %1444 = vmatprep.subr.mxu0 0.0
        %1445 = vmatpush1.msra.mxu0 0.0
        %1446 = vmatprep.subr.mxu0 0.0
        %1447 = vmatpush1.msra.mxu0 0.0
        %1448 = vmatprep.subr.mxu0 0.0
        %1449 = vmatpush1.msra.mxu0 0.0
        %1450 = vmatprep.subr.mxu0 0.0
        %1451 = vmatpush1.msra.mxu0 0.0
        %1452 = vmatprep.subr.mxu0 0.0
        %1453 = vmatpush1.msra.mxu0 0.0
        %1454 = vmatprep.subr.mxu0 0.0
        %1455 = vmatpush1.msra.mxu0 0.0
        %1456 = vmatprep.subr.mxu0 0.0
        %1457 = vmatpush1.msra.mxu0 0.0
        %1458 = vmatprep.subr.mxu0 0.0
        %1459 = vmatpush1.msra.mxu0 0.0
        %1460 = vmatprep.subr.mxu0 0.0
        %1461 = vmatpush1.msra.mxu0 0.0
        %1462 = vmatprep.subr.mxu0 0.0
        %1463 = vmatpush1.msra.mxu0 0.0
        %1464 = vmatprep.subr.mxu0 0.0
        %1465 = vmatpush1.msra.mxu0 0.0
        %1466 = vmatprep.subr.mxu0 0.0
        %1467 = vmatpush1.msra.mxu0 0.0
        %1468 = vmatprep.subr.mxu0 0.0
        %1469 = vmatpush1.msra.mxu0 0.0
        %1470 = vmatprep.subr.mxu0 0.0
        %1471 = vmatpush1.msra.mxu0 0.0
        %1472 = vmatprep.subr.mxu0 0.0
        %1473 = vmatpush1.msra.mxu0 0.0
        %1474 = vmatprep.subr.mxu0 0.0
        %1475 = vmatpush1.msra.mxu0 0.0
        %1476 = vmatprep.subr.mxu0 0.0
        %1477 = vmatpush1.msra.mxu0 0.0
        %1478 = vmatprep.subr.mxu0 0.0
        %1479 = vmatpush1.msra.mxu0 0.0
        %1480 = vmatprep.subr.mxu0 0.0
        %1481 = vmatpush1.msra.mxu0 0.0
        %1482 = vmatprep.subr.mxu0 0.0
        %1483 = vmatpush1.msra.mxu0 0.0
        %1484 = vmatprep.subr.mxu0 0.0
        %1485 = vmatpush1.msra.mxu0 0.0
        %1486 = vmatprep.subr.mxu0 0.0
        %1487 = vmatpush1.msra.mxu0 0.0
        %1488 = vmatprep.subr.mxu0 0.0
        %1489 = vmatpush1.msra.mxu0 0.0
        %1490 = vmatprep.subr.mxu0 0.0
        %1491 = vmatpush1.msra.mxu0 0.0
        %1492 = vmatprep.subr.mxu0 0.0
        %1493 = vmatpush1.msra.mxu0 0.0
        %1494 = vmatprep.subr.mxu0 0.0
        %1495 = vmatpush1.msra.mxu0 0.0
        %1496 = vmatprep.subr.mxu0 0.0
        %1497 = vmatpush1.msra.mxu0 0.0
        %1498 = vmatprep.mubr.f32.mxu0 0.0
        %1499 = vmatmul.mubr.f32.gmra.mrb[0].mxu0 %v1432
        %v1500 = vpop.f32.mrb[0].mxu0
        %v1501 = vadd.f32 %v1427, %v1500
        %v1502 = vpop.f32.mrb[0].mxu0
        %v1503 = vadd.f32 %v1429, %v1502
        %1504 = vdwg.mxu0
        %1505 = vrot.lane.b32.xlu0 %v1335, 15
        %v1506 = vpop.permute.xlu0 %1505
        %1507 = vrot.lane.b32.xlu0 %v1336, 15
        %v1508 = vpop.permute.xlu0 %1507
        %v1509 = vsel %vm641, %v1506, %v1508
        %v1510 = vsel %vm641, %v1508, %v1506
        %v1511 = vmul.f32 %v1510, %v647
        %v1512 = vmul.f32 %v1509, %v651
        %s1513 = scalar_lea.vmem %s6, 16
        %v1514 = vld [vmem:[%s1513] sm:$0xff]
        %v1516 = vsel %vm1356, %v1514, 0
        %1518 = vmatprep.subr.mxu0 %v1512
        %1519 = vmatpush1.msra.mxu0 %v1511
        %1520 = vmatprep.subr.mxu0 0.0
        %1521 = vmatpush1.msra.mxu0 0.0
        %1522 = vmatprep.subr.mxu0 0.0
        %1523 = vmatpush1.msra.mxu0 0.0
        %1524 = vmatprep.subr.mxu0 0.0
        %1525 = vmatpush1.msra.mxu0 0.0
        %1526 = vmatprep.subr.mxu0 0.0
        %1527 = vmatpush1.msra.mxu0 0.0
        %1528 = vmatprep.subr.mxu0 0.0
        %1529 = vmatpush1.msra.mxu0 0.0
        %1530 = vmatprep.subr.mxu0 0.0
        %1531 = vmatpush1.msra.mxu0 0.0
        %1532 = vmatprep.subr.mxu0 0.0
        %1533 = vmatpush1.msra.mxu0 0.0
        %1534 = vmatprep.subr.mxu0 0.0
        %1535 = vmatpush1.msra.mxu0 0.0
        %1536 = vmatprep.subr.mxu0 0.0
        %1537 = vmatpush1.msra.mxu0 0.0
        %1538 = vmatprep.subr.mxu0 0.0
        %1539 = vmatpush1.msra.mxu0 0.0
        %1540 = vmatprep.subr.mxu0 0.0
        %1541 = vmatpush1.msra.mxu0 0.0
        %1542 = vmatprep.subr.mxu0 0.0
        %1543 = vmatpush1.msra.mxu0 0.0
        %1544 = vmatprep.subr.mxu0 0.0
        %1545 = vmatpush1.msra.mxu0 0.0
        %1546 = vmatprep.subr.mxu0 0.0
        %1547 = vmatpush1.msra.mxu0 0.0
        %1548 = vmatprep.subr.mxu0 0.0
        %1549 = vmatpush1.msra.mxu0 0.0
        %1550 = vmatprep.subr.mxu0 0.0
        %1551 = vmatpush1.msra.mxu0 0.0
        %1552 = vmatprep.subr.mxu0 0.0
        %1553 = vmatpush1.msra.mxu0 0.0
        %1554 = vmatprep.subr.mxu0 0.0
        %1555 = vmatpush1.msra.mxu0 0.0
        %1556 = vmatprep.subr.mxu0 0.0
        %1557 = vmatpush1.msra.mxu0 0.0
        %1558 = vmatprep.subr.mxu0 0.0
        %1559 = vmatpush1.msra.mxu0 0.0
        %1560 = vmatprep.subr.mxu0 0.0
        %1561 = vmatpush1.msra.mxu0 0.0
        %1562 = vmatprep.subr.mxu0 0.0
        %1563 = vmatpush1.msra.mxu0 0.0
        %1564 = vmatprep.subr.mxu0 0.0
        %1565 = vmatpush1.msra.mxu0 0.0
        %1566 = vmatprep.subr.mxu0 0.0
        %1567 = vmatpush1.msra.mxu0 0.0
        %1568 = vmatprep.subr.mxu0 0.0
        %1569 = vmatpush1.msra.mxu0 0.0
        %1570 = vmatprep.subr.mxu0 0.0
        %1571 = vmatpush1.msra.mxu0 0.0
        %1572 = vmatprep.subr.mxu0 0.0
        %1573 = vmatpush1.msra.mxu0 0.0
        %1574 = vmatprep.subr.mxu0 0.0
        %1575 = vmatpush1.msra.mxu0 0.0
        %1576 = vmatprep.subr.mxu0 0.0
        %1577 = vmatpush1.msra.mxu0 0.0
        %1578 = vmatprep.subr.mxu0 0.0
        %1579 = vmatpush1.msra.mxu0 0.0
        %1580 = vmatprep.subr.mxu0 0.0
        %1581 = vmatpush1.msra.mxu0 0.0
        %1582 = vmatprep.mubr.f32.mxu0 0.0
        %1583 = vmatmul.mubr.f32.gmra.mrb[0].mxu0 %v1516
        %v1584 = vpop.f32.mrb[0].mxu0
        %v1585 = vadd.f32 0.0, %v1584
        %v1586 = vpop.f32.mrb[0].mxu0
        %v1587 = vadd.f32 0.0, %v1586
        %1588 = vdwg.mxu0
        %v1589 = vadd.f32 %v1501, %v1585
        %v1590 = vadd.f32 %v1503, %v1587
        %1591 = vrot.lane.b32.xlu0 %v1335, 1
        %v1592 = vpop.permute.xlu0 %1591
        %1593 = vrot.lane.b32.xlu0 %v1336, 1
        %v1594 = vpop.permute.xlu0 %1593
        %v1595 = vsel %vm742, %v1592, %v1594
        %v1596 = vsel %vm742, %v1594, %v1592
        %v1597 = vmul.f32 %v1596, %v748
        %v1598 = vmul.f32 %v1595, %v752
        %s1599 = scalar_lea.vmem %s6, 24
        %v1600 = vld [vmem:[%s1599] sm:$0xff]
        %v1602 = vsel %vm1356, %v1600, 0
        %1604 = vmatprep.subr.mxu0 %v1598
        %1605 = vmatpush1.msra.mxu0 %v1597
        %1606 = vmatprep.subr.mxu0 0.0
        %1607 = vmatpush1.msra.mxu0 0.0
        %1608 = vmatprep.subr.mxu0 0.0
        %1609 = vmatpush1.msra.mxu0 0.0
        %1610 = vmatprep.subr.mxu0 0.0
        %1611 = vmatpush1.msra.mxu0 0.0
        %1612 = vmatprep.subr.mxu0 0.0
        %1613 = vmatpush1.msra.mxu0 0.0
        %1614 = vmatprep.subr.mxu0 0.0
        %1615 = vmatpush1.msra.mxu0 0.0
        %1616 = vmatprep.subr.mxu0 0.0
        %1617 = vmatpush1.msra.mxu0 0.0
        %1618 = vmatprep.subr.mxu0 0.0
        %1619 = vmatpush1.msra.mxu0 0.0
        %1620 = vmatprep.subr.mxu0 0.0
        %1621 = vmatpush1.msra.mxu0 0.0
        %1622 = vmatprep.subr.mxu0 0.0
        %1623 = vmatpush1.msra.mxu0 0.0
        %1624 = vmatprep.subr.mxu0 0.0
        %1625 = vmatpush1.msra.mxu0 0.0
        %1626 = vmatprep.subr.mxu0 0.0
        %1627 = vmatpush1.msra.mxu0 0.0
        %1628 = vmatprep.subr.mxu0 0.0
        %1629 = vmatpush1.msra.mxu0 0.0
        %1630 = vmatprep.subr.mxu0 0.0
        %1631 = vmatpush1.msra.mxu0 0.0
        %1632 = vmatprep.subr.mxu0 0.0
        %1633 = vmatpush1.msra.mxu0 0.0
        %1634 = vmatprep.subr.mxu0 0.0
        %1635 = vmatpush1.msra.mxu0 0.0
        %1636 = vmatprep.subr.mxu0 0.0
        %1637 = vmatpush1.msra.mxu0 0.0
        %1638 = vmatprep.subr.mxu0 0.0
        %1639 = vmatpush1.msra.mxu0 0.0
        %1640 = vmatprep.subr.mxu0 0.0
        %1641 = vmatpush1.msra.mxu0 0.0
        %1642 = vmatprep.subr.mxu0 0.0
        %1643 = vmatpush1.msra.mxu0 0.0
        %1644 = vmatprep.subr.mxu0 0.0
        %1645 = vmatpush1.msra.mxu0 0.0
        %1646 = vmatprep.subr.mxu0 0.0
        %1647 = vmatpush1.msra.mxu0 0.0
        %1648 = vmatprep.subr.mxu0 0.0
        %1649 = vmatpush1.msra.mxu0 0.0
        %1650 = vmatprep.subr.mxu0 0.0
        %1651 = vmatpush1.msra.mxu0 0.0
        %1652 = vmatprep.subr.mxu0 0.0
        %1653 = vmatpush1.msra.mxu0 0.0
        %1654 = vmatprep.subr.mxu0 0.0
        %1655 = vmatpush1.msra.mxu0 0.0
        %1656 = vmatprep.subr.mxu0 0.0
        %1657 = vmatpush1.msra.mxu0 0.0
        %1658 = vmatprep.subr.mxu0 0.0
        %1659 = vmatpush1.msra.mxu0 0.0
        %1660 = vmatprep.subr.mxu0 0.0
        %1661 = vmatpush1.msra.mxu0 0.0
        %1662 = vmatprep.subr.mxu0 0.0
        %1663 = vmatpush1.msra.mxu0 0.0
        %1664 = vmatprep.subr.mxu0 0.0
        %1665 = vmatpush1.msra.mxu0 0.0
        %1666 = vmatprep.subr.mxu0 0.0
        %1667 = vmatpush1.msra.mxu0 0.0
        %1668 = vmatprep.mubr.f32.mxu0 0.0
        %1669 = vmatmul.mubr.f32.gmra.mrb[0].mxu0 %v1602
        %v1670 = vpop.f32.mrb[0].mxu0
        %v1671 = vadd.f32 0.0, %v1670
        %v1672 = vpop.f32.mrb[0].mxu0
        %v1673 = vadd.f32 0.0, %v1672
        %1674 = vdwg.mxu0
        %v1675 = vadd.f32 %v1589, %v1671
        %v1676 = vadd.f32 %v1590, %v1673
        %s1677 = scalar_lea.vmem %s6, 32
        %v1678 = vld [vmem:[%s1677] sm:$0xff]
        %v1680 = vsel %vm1356, %v1678, 0
        %1682 = vmatprep.subr.mxu0 %v1336
        %1683 = vmatpush1.msra.mxu0 %v1335
        %1684 = vmatprep.subr.mxu0 0.0
        %1685 = vmatpush1.msra.mxu0 0.0
        %1686 = vmatprep.subr.mxu0 0.0
        %1687 = vmatpush1.msra.mxu0 0.0
        %1688 = vmatprep.subr.mxu0 0.0
        %1689 = vmatpush1.msra.mxu0 0.0
        %1690 = vmatprep.subr.mxu0 0.0
        %1691 = vmatpush1.msra.mxu0 0.0
        %1692 = vmatprep.subr.mxu0 0.0
        %1693 = vmatpush1.msra.mxu0 0.0
        %1694 = vmatprep.subr.mxu0 0.0
        %1695 = vmatpush1.msra.mxu0 0.0
        %1696 = vmatprep.subr.mxu0 0.0
        %1697 = vmatpush1.msra.mxu0 0.0
        %1698 = vmatprep.subr.mxu0 0.0
        %1699 = vmatpush1.msra.mxu0 0.0
        %1700 = vmatprep.subr.mxu0 0.0
        %1701 = vmatpush1.msra.mxu0 0.0
        %1702 = vmatprep.subr.mxu0 0.0
        %1703 = vmatpush1.msra.mxu0 0.0
        %1704 = vmatprep.subr.mxu0 0.0
        %1705 = vmatpush1.msra.mxu0 0.0
        %1706 = vmatprep.subr.mxu0 0.0
        %1707 = vmatpush1.msra.mxu0 0.0
        %1708 = vmatprep.subr.mxu0 0.0
        %1709 = vmatpush1.msra.mxu0 0.0
        %1710 = vmatprep.subr.mxu0 0.0
        %1711 = vmatpush1.msra.mxu0 0.0
        %1712 = vmatprep.subr.mxu0 0.0
        %1713 = vmatpush1.msra.mxu0 0.0
        %1714 = vmatprep.subr.mxu0 0.0
        %1715 = vmatpush1.msra.mxu0 0.0
        %1716 = vmatprep.subr.mxu0 0.0
        %1717 = vmatpush1.msra.mxu0 0.0
        %1718 = vmatprep.subr.mxu0 0.0
        %1719 = vmatpush1.msra.mxu0 0.0
        %1720 = vmatprep.subr.mxu0 0.0
        %1721 = vmatpush1.msra.mxu0 0.0
        %1722 = vmatprep.subr.mxu0 0.0
        %1723 = vmatpush1.msra.mxu0 0.0
        %1724 = vmatprep.subr.mxu0 0.0
        %1725 = vmatpush1.msra.mxu0 0.0
        %1726 = vmatprep.subr.mxu0 0.0
        %1727 = vmatpush1.msra.mxu0 0.0
        %1728 = vmatprep.subr.mxu0 0.0
        %1729 = vmatpush1.msra.mxu0 0.0
        %1730 = vmatprep.subr.mxu0 0.0
        %1731 = vmatpush1.msra.mxu0 0.0
        %1732 = vmatprep.subr.mxu0 0.0
        %1733 = vmatpush1.msra.mxu0 0.0
        %1734 = vmatprep.subr.mxu0 0.0
        %1735 = vmatpush1.msra.mxu0 0.0
        %1736 = vmatprep.subr.mxu0 0.0
        %1737 = vmatpush1.msra.mxu0 0.0
        %1738 = vmatprep.subr.mxu0 0.0
        %1739 = vmatpush1.msra.mxu0 0.0
        %1740 = vmatprep.subr.mxu0 0.0
        %1741 = vmatpush1.msra.mxu0 0.0
        %1742 = vmatprep.subr.mxu0 0.0
        %1743 = vmatpush1.msra.mxu0 0.0
        %1744 = vmatprep.subr.mxu0 0.0
        %1745 = vmatpush1.msra.mxu0 0.0
        %1746 = vmatprep.mubr.f32.mxu0 0.0
        %1747 = vmatmul.mubr.f32.gmra.mrb[0].mxu0 %v1680
        %v1748 = vpop.f32.mrb[0].mxu0
        %v1749 = vadd.f32 0.0, %v1748
        %v1750 = vpop.f32.mrb[0].mxu0
        %v1751 = vadd.f32 0.0, %v1750
        %1752 = vdwg.mxu0
        %v1753 = vadd.f32 %v1675, %v1749
        %v1754 = vadd.f32 %v1676, %v1751
        %1755 = vrot.lane.b32.xlu0 %v1335, 127
        %v1756 = vpop.permute.xlu0 %1755
        %1757 = vrot.lane.b32.xlu0 %v1336, 127
        %v1758 = vpop.permute.xlu0 %1757
        %v1759 = vsel %vm927, %v1756, %v1758
        %v1760 = vsel %vm927, %v1758, %v1756
        %v1761 = vmul.f32 %v1759, %v933
        %v1762 = vmul.f32 %v1760, %v937
        %s1763 = scalar_lea.vmem %s6, 40
        %v1764 = vld [vmem:[%s1763] sm:$0xff]
        %v1766 = vsel %vm1356, %v1764, 0
        %1768 = vmatprep.subr.mxu0 %v1762
        %1769 = vmatpush1.msra.mxu0 %v1761
        %1770 = vmatprep.subr.mxu0 0.0
        %1771 = vmatpush1.msra.mxu0 0.0
        %1772 = vmatprep.subr.mxu0 0.0
        %1773 = vmatpush1.msra.mxu0 0.0
        %1774 = vmatprep.subr.mxu0 0.0
        %1775 = vmatpush1.msra.mxu0 0.0
        %1776 = vmatprep.subr.mxu0 0.0
        %1777 = vmatpush1.msra.mxu0 0.0
        %1778 = vmatprep.subr.mxu0 0.0
        %1779 = vmatpush1.msra.mxu0 0.0
        %1780 = vmatprep.subr.mxu0 0.0
        %1781 = vmatpush1.msra.mxu0 0.0
        %1782 = vmatprep.subr.mxu0 0.0
        %1783 = vmatpush1.msra.mxu0 0.0
        %1784 = vmatprep.subr.mxu0 0.0
        %1785 = vmatpush1.msra.mxu0 0.0
        %1786 = vmatprep.subr.mxu0 0.0
        %1787 = vmatpush1.msra.mxu0 0.0
        %1788 = vmatprep.subr.mxu0 0.0
        %1789 = vmatpush1.msra.mxu0 0.0
        %1790 = vmatprep.subr.mxu0 0.0
        %1791 = vmatpush1.msra.mxu0 0.0
        %1792 = vmatprep.subr.mxu0 0.0
        %1793 = vmatpush1.msra.mxu0 0.0
        %1794 = vmatprep.subr.mxu0 0.0
        %1795 = vmatpush1.msra.mxu0 0.0
        %1796 = vmatprep.subr.mxu0 0.0
        %1797 = vmatpush1.msra.mxu0 0.0
        %1798 = vmatprep.subr.mxu0 0.0
        %1799 = vmatpush1.msra.mxu0 0.0
        %1800 = vmatprep.subr.mxu0 0.0
        %1801 = vmatpush1.msra.mxu0 0.0
        %1802 = vmatprep.subr.mxu0 0.0
        %1803 = vmatpush1.msra.mxu0 0.0
        %1804 = vmatprep.subr.mxu0 0.0
        %1805 = vmatpush1.msra.mxu0 0.0
        %1806 = vmatprep.subr.mxu0 0.0
        %1807 = vmatpush1.msra.mxu0 0.0
        %1808 = vmatprep.subr.mxu0 0.0
        %1809 = vmatpush1.msra.mxu0 0.0
        %1810 = vmatprep.subr.mxu0 0.0
        %1811 = vmatpush1.msra.mxu0 0.0
        %1812 = vmatprep.subr.mxu0 0.0
        %1813 = vmatpush1.msra.mxu0 0.0
        %1814 = vmatprep.subr.mxu0 0.0
        %1815 = vmatpush1.msra.mxu0 0.0
        %1816 = vmatprep.subr.mxu0 0.0
        %1817 = vmatpush1.msra.mxu0 0.0
        %1818 = vmatprep.subr.mxu0 0.0
        %1819 = vmatpush1.msra.mxu0 0.0
        %1820 = vmatprep.subr.mxu0 0.0
        %1821 = vmatpush1.msra.mxu0 0.0
        %1822 = vmatprep.subr.mxu0 0.0
        %1823 = vmatpush1.msra.mxu0 0.0
        %1824 = vmatprep.subr.mxu0 0.0
        %1825 = vmatpush1.msra.mxu0 0.0
        %1826 = vmatprep.subr.mxu0 0.0
        %1827 = vmatpush1.msra.mxu0 0.0
        %1828 = vmatprep.subr.mxu0 0.0
        %1829 = vmatpush1.msra.mxu0 0.0
        %1830 = vmatprep.subr.mxu0 0.0
        %1831 = vmatpush1.msra.mxu0 0.0
        %1832 = vmatprep.mubr.f32.mxu0 0.0
        %1833 = vmatmul.mubr.f32.gmra.mrb[0].mxu0 %v1766
        %v1834 = vpop.f32.mrb[0].mxu0
        %v1835 = vadd.f32 0.0, %v1834
        %v1836 = vpop.f32.mrb[0].mxu0
        %v1837 = vadd.f32 0.0, %v1836
        %1838 = vdwg.mxu0
        %v1839 = vadd.f32 %v1753, %v1835
        %v1840 = vadd.f32 %v1754, %v1837
        %1841 = vrot.lane.b32.xlu0 %v1335, 113
        %v1842 = vpop.permute.xlu0 %1841
        %1843 = vrot.lane.b32.xlu0 %v1336, 113
        %v1844 = vpop.permute.xlu0 %1843
        %v1845 = vsel %vm1028, %v1842, %v1844
        %v1846 = vsel %vm1028, %v1844, %v1842
        %v1847 = vmul.f32 %v1845, %v1034
        %v1848 = vmul.f32 %v1846, %v1038
        %s1849 = scalar_lea.vmem %s6, 48
        %v1850 = vld [vmem:[%s1849] sm:$0xff]
        %v1852 = vsel %vm1356, %v1850, 0
        %1854 = vmatprep.subr.mxu0 %v1848
        %1855 = vmatpush1.msra.mxu0 %v1847
        %1856 = vmatprep.subr.mxu0 0.0
        %1857 = vmatpush1.msra.mxu0 0.0
        %1858 = vmatprep.subr.mxu0 0.0
        %1859 = vmatpush1.msra.mxu0 0.0
        %1860 = vmatprep.subr.mxu0 0.0
        %1861 = vmatpush1.msra.mxu0 0.0
        %1862 = vmatprep.subr.mxu0 0.0
        %1863 = vmatpush1.msra.mxu0 0.0
        %1864 = vmatprep.subr.mxu0 0.0
        %1865 = vmatpush1.msra.mxu0 0.0
        %1866 = vmatprep.subr.mxu0 0.0
        %1867 = vmatpush1.msra.mxu0 0.0
        %1868 = vmatprep.subr.mxu0 0.0
        %1869 = vmatpush1.msra.mxu0 0.0
        %1870 = vmatprep.subr.mxu0 0.0
        %1871 = vmatpush1.msra.mxu0 0.0
        %1872 = vmatprep.subr.mxu0 0.0
        %1873 = vmatpush1.msra.mxu0 0.0
        %1874 = vmatprep.subr.mxu0 0.0
        %1875 = vmatpush1.msra.mxu0 0.0
        %1876 = vmatprep.subr.mxu0 0.0
        %1877 = vmatpush1.msra.mxu0 0.0
        %1878 = vmatprep.subr.mxu0 0.0
        %1879 = vmatpush1.msra.mxu0 0.0
        %1880 = vmatprep.subr.mxu0 0.0
        %1881 = vmatpush1.msra.mxu0 0.0
        %1882 = vmatprep.subr.mxu0 0.0
        %1883 = vmatpush1.msra.mxu0 0.0
        %1884 = vmatprep.subr.mxu0 0.0
        %1885 = vmatpush1.msra.mxu0 0.0
        %1886 = vmatprep.subr.mxu0 0.0
        %1887 = vmatpush1.msra.mxu0 0.0
        %1888 = vmatprep.subr.mxu0 0.0
        %1889 = vmatpush1.msra.mxu0 0.0
        %1890 = vmatprep.subr.mxu0 0.0
        %1891 = vmatpush1.msra.mxu0 0.0
        %1892 = vmatprep.subr.mxu0 0.0
        %1893 = vmatpush1.msra.mxu0 0.0
        %1894 = vmatprep.subr.mxu0 0.0
        %1895 = vmatpush1.msra.mxu0 0.0
        %1896 = vmatprep.subr.mxu0 0.0
        %1897 = vmatpush1.msra.mxu0 0.0
        %1898 = vmatprep.subr.mxu0 0.0
        %1899 = vmatpush1.msra.mxu0 0.0
        %1900 = vmatprep.subr.mxu0 0.0
        %1901 = vmatpush1.msra.mxu0 0.0
        %1902 = vmatprep.subr.mxu0 0.0
        %1903 = vmatpush1.msra.mxu0 0.0
        %1904 = vmatprep.subr.mxu0 0.0
        %1905 = vmatpush1.msra.mxu0 0.0
        %1906 = vmatprep.subr.mxu0 0.0
        %1907 = vmatpush1.msra.mxu0 0.0
        %1908 = vmatprep.subr.mxu0 0.0
        %1909 = vmatpush1.msra.mxu0 0.0
        %1910 = vmatprep.subr.mxu0 0.0
        %1911 = vmatpush1.msra.mxu0 0.0
        %1912 = vmatprep.subr.mxu0 0.0
        %1913 = vmatpush1.msra.mxu0 0.0
        %1914 = vmatprep.subr.mxu0 0.0
        %1915 = vmatpush1.msra.mxu0 0.0
        %1916 = vmatprep.subr.mxu0 0.0
        %1917 = vmatpush1.msra.mxu0 0.0
        %1918 = vmatprep.mubr.f32.mxu0 0.0
        %1919 = vmatmul.mubr.f32.gmra.mrb[0].mxu0 %v1852
        %v1920 = vpop.f32.mrb[0].mxu0
        %v1921 = vadd.f32 0.0, %v1920
        %v1922 = vpop.f32.mrb[0].mxu0
        %v1923 = vadd.f32 0.0, %v1922
        %1924 = vdwg.mxu0
        %v1925 = vadd.f32 %v1839, %v1921
        %v1926 = vadd.f32 %v1840, %v1923
        %1927 = vrot.lane.b32.xlu0 %v1335, 112
        %v1928 = vpop.permute.xlu0 %1927
        %1929 = vrot.lane.b32.xlu0 %v1336, 112
        %v1930 = vpop.permute.xlu0 %1929
        %v1931 = vsel %vm1129, %v1928, %v1930
        %v1932 = vsel %vm1129, %v1930, %v1928
        %v1933 = vmul.f32 %v1931, %v1135
        %v1934 = vmul.f32 %v1932, %v1139
        %s1935 = scalar_lea.vmem %s6, 56
        %v1936 = vld [vmem:[%s1935] sm:$0xff]
        %v1938 = vsel %vm1356, %v1936, 0
        %1940 = vmatprep.subr.mxu0 %v1934
        %1941 = vmatpush1.msra.mxu0 %v1933
        %1942 = vmatprep.subr.mxu0 0.0
        %1943 = vmatpush1.msra.mxu0 0.0
        %1944 = vmatprep.subr.mxu0 0.0
        %1945 = vmatpush1.msra.mxu0 0.0
        %1946 = vmatprep.subr.mxu0 0.0
        %1947 = vmatpush1.msra.mxu0 0.0
        %1948 = vmatprep.subr.mxu0 0.0
        %1949 = vmatpush1.msra.mxu0 0.0
        %1950 = vmatprep.subr.mxu0 0.0
        %1951 = vmatpush1.msra.mxu0 0.0
        %1952 = vmatprep.subr.mxu0 0.0
        %1953 = vmatpush1.msra.mxu0 0.0
        %1954 = vmatprep.subr.mxu0 0.0
        %1955 = vmatpush1.msra.mxu0 0.0
        %1956 = vmatprep.subr.mxu0 0.0
        %1957 = vmatpush1.msra.mxu0 0.0
        %1958 = vmatprep.subr.mxu0 0.0
        %1959 = vmatpush1.msra.mxu0 0.0
        %1960 = vmatprep.subr.mxu0 0.0
        %1961 = vmatpush1.msra.mxu0 0.0
        %1962 = vmatprep.subr.mxu0 0.0
        %1963 = vmatpush1.msra.mxu0 0.0
        %1964 = vmatprep.subr.mxu0 0.0
        %1965 = vmatpush1.msra.mxu0 0.0
        %1966 = vmatprep.subr.mxu0 0.0
        %1967 = vmatpush1.msra.mxu0 0.0
        %1968 = vmatprep.subr.mxu0 0.0
        %1969 = vmatpush1.msra.mxu0 0.0
        %1970 = vmatprep.subr.mxu0 0.0
        %1971 = vmatpush1.msra.mxu0 0.0
        %1972 = vmatprep.subr.mxu0 0.0
        %1973 = vmatpush1.msra.mxu0 0.0
        %1974 = vmatprep.subr.mxu0 0.0
        %1975 = vmatpush1.msra.mxu0 0.0
        %1976 = vmatprep.subr.mxu0 0.0
        %1977 = vmatpush1.msra.mxu0 0.0
        %1978 = vmatprep.subr.mxu0 0.0
        %1979 = vmatpush1.msra.mxu0 0.0
        %1980 = vmatprep.subr.mxu0 0.0
        %1981 = vmatpush1.msra.mxu0 0.0
        %1982 = vmatprep.subr.mxu0 0.0
        %1983 = vmatpush1.msra.mxu0 0.0
        %1984 = vmatprep.subr.mxu0 0.0
        %1985 = vmatpush1.msra.mxu0 0.0
        %1986 = vmatprep.subr.mxu0 0.0
        %1987 = vmatpush1.msra.mxu0 0.0
        %1988 = vmatprep.subr.mxu0 0.0
        %1989 = vmatpush1.msra.mxu0 0.0
        %1990 = vmatprep.subr.mxu0 0.0
        %1991 = vmatpush1.msra.mxu0 0.0
        %1992 = vmatprep.subr.mxu0 0.0
        %1993 = vmatpush1.msra.mxu0 0.0
        %1994 = vmatprep.subr.mxu0 0.0
        %1995 = vmatpush1.msra.mxu0 0.0
        %1996 = vmatprep.subr.mxu0 0.0
        %1997 = vmatpush1.msra.mxu0 0.0
        %1998 = vmatprep.subr.mxu0 0.0
        %1999 = vmatpush1.msra.mxu0 0.0
        %2000 = vmatprep.subr.mxu0 0.0
        %2001 = vmatpush1.msra.mxu0 0.0
        %2002 = vmatprep.subr.mxu0 0.0
        %2003 = vmatpush1.msra.mxu0 0.0
        %2004 = vmatprep.mubr.f32.mxu0 0.0
        %2005 = vmatmul.mubr.f32.gmra.mrb[0].mxu0 %v1938
        %v2006 = vpop.f32.mrb[0].mxu0
        %v2007 = vadd.f32 0.0, %v2006
        %v2008 = vpop.f32.mrb[0].mxu0
        %v2009 = vadd.f32 0.0, %v2008
        %2010 = vdwg.mxu0
        %v2011 = vadd.f32 %v1925, %v2007
        %v2012 = vadd.f32 %v1926, %v2009
        %2013 = vrot.lane.b32.xlu0 %v1335, 111
        %v2014 = vpop.permute.xlu0 %2013
        %2015 = vrot.lane.b32.xlu0 %v1336, 111
        %v2016 = vpop.permute.xlu0 %2015
        %v2017 = vsel %vm1230, %v2014, %v2016
        %v2018 = vsel %vm1230, %v2016, %v2014
        %v2019 = vmul.f32 %v2017, %v1236
        %v2020 = vmul.f32 %v2018, %v1240
        %s2021 = scalar_lea.vmem %s6, 64
        %v2022 = vld [vmem:[%s2021] sm:$0xff]
        %v2024 = vsel %vm1356, %v2022, 0
        %2026 = vmatprep.subr.mxu0 %v2020
        %2027 = vmatpush1.msra.mxu0 %v2019
        %2028 = vmatprep.subr.mxu0 0.0
        %2029 = vmatpush1.msra.mxu0 0.0
        %2030 = vmatprep.subr.mxu0 0.0
        %2031 = vmatpush1.msra.mxu0 0.0
        %2032 = vmatprep.subr.mxu0 0.0
        %2033 = vmatpush1.msra.mxu0 0.0
        %2034 = vmatprep.subr.mxu0 0.0
        %2035 = vmatpush1.msra.mxu0 0.0
        %2036 = vmatprep.subr.mxu0 0.0
        %2037 = vmatpush1.msra.mxu0 0.0
        %2038 = vmatprep.subr.mxu0 0.0
        %2039 = vmatpush1.msra.mxu0 0.0
        %2040 = vmatprep.subr.mxu0 0.0
        %2041 = vmatpush1.msra.mxu0 0.0
        %2042 = vmatprep.subr.mxu0 0.0
        %2043 = vmatpush1.msra.mxu0 0.0
        %2044 = vmatprep.subr.mxu0 0.0
        %2045 = vmatpush1.msra.mxu0 0.0
        %2046 = vmatprep.subr.mxu0 0.0
        %2047 = vmatpush1.msra.mxu0 0.0
        %2048 = vmatprep.subr.mxu0 0.0
        %2049 = vmatpush1.msra.mxu0 0.0
        %2050 = vmatprep.subr.mxu0 0.0
        %2051 = vmatpush1.msra.mxu0 0.0
        %2052 = vmatprep.subr.mxu0 0.0
        %2053 = vmatpush1.msra.mxu0 0.0
        %2054 = vmatprep.subr.mxu0 0.0
        %2055 = vmatpush1.msra.mxu0 0.0
        %2056 = vmatprep.subr.mxu0 0.0
        %2057 = vmatpush1.msra.mxu0 0.0
        %2058 = vmatprep.subr.mxu0 0.0
        %2059 = vmatpush1.msra.mxu0 0.0
        %2060 = vmatprep.subr.mxu0 0.0
        %2061 = vmatpush1.msra.mxu0 0.0
        %2062 = vmatprep.subr.mxu0 0.0
        %2063 = vmatpush1.msra.mxu0 0.0
        %2064 = vmatprep.subr.mxu0 0.0
        %2065 = vmatpush1.msra.mxu0 0.0
        %2066 = vmatprep.subr.mxu0 0.0
        %2067 = vmatpush1.msra.mxu0 0.0
        %2068 = vmatprep.subr.mxu0 0.0
        %2069 = vmatpush1.msra.mxu0 0.0
        %2070 = vmatprep.subr.mxu0 0.0
        %2071 = vmatpush1.msra.mxu0 0.0
        %2072 = vmatprep.subr.mxu0 0.0
        %2073 = vmatpush1.msra.mxu0 0.0
        %2074 = vmatprep.subr.mxu0 0.0
        %2075 = vmatpush1.msra.mxu0 0.0
        %2076 = vmatprep.subr.mxu0 0.0
        %2077 = vmatpush1.msra.mxu0 0.0
        %2078 = vmatprep.subr.mxu0 0.0
        %2079 = vmatpush1.msra.mxu0 0.0
        %2080 = vmatprep.subr.mxu0 0.0
        %2081 = vmatpush1.msra.mxu0 0.0
        %2082 = vmatprep.subr.mxu0 0.0
        %2083 = vmatpush1.msra.mxu0 0.0
        %2084 = vmatprep.subr.mxu0 0.0
        %2085 = vmatpush1.msra.mxu0 0.0
        %2086 = vmatprep.subr.mxu0 0.0
        %2087 = vmatpush1.msra.mxu0 0.0
        %2088 = vmatprep.subr.mxu0 0.0
        %2089 = vmatpush1.msra.mxu0 0.0
        %2090 = vmatprep.mubr.f32.mxu0 0.0
        %2091 = vmatmul.mubr.f32.gmra.mrb[0].mxu0 %v2024
        %v2092 = vpop.f32.mrb[0].mxu0
        %v2093 = vadd.f32 0.0, %v2092
        %v2094 = vpop.f32.mrb[0].mxu0
        %v2095 = vadd.f32 0.0, %v2094
        %2096 = vdwg.mxu0
        %v2097 = vadd.f32 %v2011, %v2093
        %v2098 = vadd.f32 %v2012, %v2095
        %v2099 = vld [vmem:[%s7] sm:$0xff]
        %2101 = vset.pattern.permute.xlu0 0
        %2102 = vperm.xlu0 %2101, %v2099
        %v2103 = vpop.permute.xlu0 %2102
        %v2105 = vadd.f32 %v2097, %v2103
        %v2106 = vadd.f32 %v2098, %v2103
        %v2107 = vmax.f32 %v2105, 0.0
        %v2108 = vmax.f32 %v2106, 0.0
        %2109 = vst [vmem:[%s311] sm:$0xff] %v2107
        %2110 = vst [vmem:[%s311 + $0x8] sm:$0xff] %v2108
        %s2111 = sand.u32 %s208, 1
        %s2112 = scalar_lea.sflag [#allocation3], %s2111
        %s2113 = sand.u32 %s208, 1
        %s2114 = smul.addr %s2113, 16
        %s2115 = scalar_lea.vmem [#allocation2], %s2114
        // Predicated region
        $region53: #{tpu_custom_call.1} parent=51 // pred_check
          %p2116 = pneg %p218
        $region54: #{tpu_custom_call.1} parent=51 // pred_check_branch
          %2118 = sbr.rel (%p2116) target = $region56
        $region55: #{tpu_custom_call.1} parent=51 // pred_region
          %s2120 = ssub.s32 256, 256
          %2121 = vsyncadd %s2112, %s2120
          %s2122 = smul.addr %s22, 2
          %s2123 = smul.addr %s2122, 128
          %s2124 = scalar_lea.hbm %s8, %s2123
          %s2126 = sshll.u32 %s2115, 4
          %s2127 = int_to_ptr.vmem [resolvable:$true] %s2126
          %2129 = dma.vmem_to_hbm [thread:$0]  %s2127, 256, %s2124, %s2112
        $region56: #{tpu_custom_call.1} parent=51 // pred_fallthru
          _
      $region52: #{tpu_custom_call.1} parent=5 // pred_fallthru
        _
      %p2130 = scmp.le.s32.totalorder 2, %s17
      // Predicated region
      $region57: #{tpu_custom_call.1} parent=5 // pred_check
        %p2131 = pneg %p2130
      $region58: #{tpu_custom_call.1} parent=5 // pred_check_branch
        %2133 = sbr.rel (%p2131) target = $region60
      $region59: #{tpu_custom_call.1} parent=5 // pred_region
        %s2134 = ssub.s32 %s17, 2
        // Predicated region
        $region61: #{tpu_custom_call.1} parent=59 // pred_check
          %p2135 = pneg %p224
        $region62: #{tpu_custom_call.1} parent=59 // pred_check_branch
          %2137 = sbr.rel (%p2135) target = $region64
        $region63: #{tpu_custom_call.1} parent=59 // pred_region
          %s2138 = sand.u32 %s209, 1
          %s2139 = scalar_lea.sflag [#allocation3], %s2138
          %s2140 = sand.u32 %s209, 1
          %s2141 = smul.addr %s2140, 16
          %s2142 = scalar_lea.vmem [#allocation2], %s2141
          %2143 = dma.done %s2139, 256
        $region64: #{tpu_custom_call.1} parent=59 // pred_fallthru
          _
      $region60: #{tpu_custom_call.1} parent=5 // pred_fallthru
        _
    $region6: #{tpu_custom_call.1} parent=1 // loop_footer
      %s21 = sadd.s32 1, %s17
    $region7: #{tpu_custom_call.1} parent=1 // loop_footer_branch
      %16 = sbr.rel target = $region3
    $region8: #{tpu_custom_call.1} parent=1 // loop_exit
      _
    %2144 = vsyncpa [#allocation3], 1
    %s2145 = scalar_lea.sflag [#allocation3], 1
    %2146 = vsyncpa %s2145, 1

</llo_original>
